<compile_context>
chip_gen: v5e
topology: v5e:2x2
jax: 0.10.0
libtpu: 0.0.40
codegen_flags: <defaults>
</compile_context>

<pallas_src>
import jax
import jax.numpy as jnp
from jax.experimental import pallas as pl
from jax.experimental.pallas import tpu as pltpu


# ---------------------------------------------------------------------------
# Kernel: one (batch, height-tile) step = bilinear x4 upsample + channel softmax
# ---------------------------------------------------------------------------
def _upsample_softmax_kernel(x_ref, awt_ref, out_ref):
    """
    x_ref   : (C, H+2, W)      f32   replicate-padded input (whole batch element, resident)
    awt_ref : (W, Wout)        bf16  transposed width interpolation matrix (Wout = 4W)
    out_ref : (C, TH, 4*Wout)  bf16  output block, phase-major lanes:
                                     out[c, q, r*Wout + j] == y[c, 4*(t*TH+q)+r, j]
    """
    C = x_ref.shape[0]
    W = x_ref.shape[2]
    TH = out_ref.shape[1]
    Wout = awt_ref.shape[1]

    # Halo tile: padded rows [t*TH, t*TH + TH + 2).  Padded row (t*TH + q)
    # corresponds to original row h-1 (clamped), h = t*TH + q.
    row0 = pl.program_id(1) * TH
    if TH % 8 == 0:
        row0 = pl.multiple_of(row0, 8)
    xt = x_ref[:, pl.ds(row0, TH + 2), :]          # (C, TH+2, W) f32

    a0 = xt[:, 0:TH, :]          # original row h-1 (edge-clamped via replicate pad)
    a1 = xt[:, 1:TH + 1, :]      # original row h
    a2 = xt[:, 2:TH + 2, :]      # original row h+1 (edge-clamped via replicate pad)

    awt = awt_ref[...]           # (W, Wout) bf16

    # align_corners=False, scale=4: output row 4h+r uses these 2-tap weights.
    phases = (
        (0.375, a0, 0.625, a1),  # r = 0
        (0.125, a0, 0.875, a1),  # r = 1
        (0.875, a1, 0.125, a2),  # r = 2
        (0.625, a1, 0.375, a2),  # r = 3
    )

    for r, (wl, lo, wh, hi) in enumerate(phases):
        # Height upsample: 2-tap VPU weighted add in f32.
        p = wl * lo + wh * hi                                     # (C, TH, W) f32

        # Width upsample: one lane-dense MXU matmul (bf16 operands, f32 acc).
        up = jnp.dot(p.reshape(C * TH, W).astype(jnp.bfloat16), awt,
                     preferred_element_type=jnp.float32)          # (C*TH, Wout)
        up = up.reshape(C, TH, Wout)

        # Channel softmax (leading axis) -> unrolled VPU/EUP elementwise chains.
        m = jnp.max(up, axis=0, keepdims=True)
        e = jnp.exp(up - m)
        s = jnp.sum(e, axis=0, keepdims=True)
        y = e * pl.reciprocal(s, approx=True)

        # Phase r lands in lane block [r*Wout, (r+1)*Wout) of the output tile.
        out_ref[:, :, r * Wout:(r + 1) * Wout] = y.astype(out_ref.dtype)


# ---------------------------------------------------------------------------
# Width interpolation matrix (PyTorch align_corners=False semantics)
# ---------------------------------------------------------------------------
def bilinear_matrix(in_size, scale=4):
    """Full (out, in) bilinear matrix with PyTorch's edge clamping."""
    out_size = in_size * scale
    dst = jnp.arange(out_size, dtype=jnp.float32)
    src = jnp.maximum((dst + 0.5) / scale - 0.5, 0.0)     # clamp negative src
    lo = jnp.floor(src).astype(jnp.int32)
    hi = jnp.minimum(lo + 1, in_size - 1)
    frac = src - lo.astype(jnp.float32)
    rows = jnp.arange(out_size)
    m = jnp.zeros((out_size, in_size), jnp.float32)
    m = m.at[rows, lo].add(1.0 - frac)
    m = m.at[rows, hi].add(frac)
    return m


# ---------------------------------------------------------------------------
# VMEM-budget based tile_h choice (review #4 / #6)
# ---------------------------------------------------------------------------
def _vmem_estimate_bytes(C, H, W, th):
    in_resident = 2 * C * (H + 2) * W * 4           # padded f32 input, double-buffered
    out_block = 2 * C * th * 16 * W * 2             # bf16 output block, double-buffered
    awt_bytes = 2 * W * (4 * W) * 2                 # bf16 width matrix
    taps = 4 * C * (th + 2) * W * 4                 # halo tile + 3 row-shifted slices (f32)
    per_phase = 2 * C * th * (4 * W) * 4 + 2 * C * th * W * 4   # up/e f32 + bf16 staging
    return in_resident + out_block + awt_bytes + taps + per_phase


def _choose_tile_h(C, H, W, budget_bytes):
    # Block-shape rule: TH must be a multiple of 8 (or the full H).
    cands = [th for th in range(8, H + 1, 8) if H % th == 0]
    if not cands:
        return H
    best = cands[0]
    for th in cands:                                # ascending -> keep largest that fits
        if _vmem_estimate_bytes(C, H, W, th) <= budget_bytes:
            best = th
    return best


# ---------------------------------------------------------------------------
# Wrapper: NCHW in -> NCHW out (bf16), grid = (N, n_height_tiles)
# ---------------------------------------------------------------------------
def c1_8090_forward(x_nchw, tile_h=None, out_dtype=jnp.bfloat16,
                    vmem_budget_bytes=40 * 1024 * 1024):
    """softmax(bilinear_x4(x, align_corners=False), dim=1)."""
    N, C, H, W = x_nchw.shape
    scale = 4
    Hout, Wout = scale * H, scale * W

    x = x_nchw.astype(jnp.float32)
    # Replicate-pad H by one row each side; together with the 2-tap phase weights
    # this reproduces PyTorch's align_corners=False edge clamping exactly.
    xp = jnp.concatenate([x[:, :, :1], x, x[:, :, -1:]], axis=2)   # (N, C, H+2, W)

    if tile_h is None:
        tile_h = _choose_tile_h(C, H, W, vmem_budget_bytes)
    TH = tile_h
    assert H % TH == 0 and (TH % 8 == 0 or TH == H), (H, TH)
    num_t = H // TH

    awt = bilinear_matrix(W, scale).T.astype(jnp.bfloat16)   # (W, 4W); weights exact in bf16

    out = pl.pallas_call(
        _upsample_softmax_kernel,
        # Output presented as (N, C, H, 16*W): the 4 height phases of a source row
        # are folded into the lane axis (phase-major == NCHW memory order).
        out_shape=jax.ShapeDtypeStruct((N, C, H, scale * Wout), out_dtype),
        grid=(N, num_t),
        in_specs=[
            # Whole padded batch element resident in VMEM; kernel slices its halo tile.
            # TODO(synk): for production-size C*H*W, use pl.Element row offsets / a W
            # grid axis so the resident input fits v7x's 64 MiB VMEM.
            pl.BlockSpec((None, C, H + 2, W), lambda n, t: (n, 0, 0, 0)),
            pl.BlockSpec((W, Wout), lambda n, t: (0, 0)),
        ],
        out_specs=pl.BlockSpec((None, C, TH, scale * Wout),
                               lambda n, t: (n, 0, t, 0)),
        compiler_params=pltpu.CompilerParams(
            dimension_semantics=("parallel", "parallel"),
            vmem_limit_bytes=64 * 1024 * 1024),
    )(xp, awt)

    # (N, C, H, 16W) -> (N, C, 4H, 4W): pure metadata reshape (same memory layout).
    return out.reshape(N, C, Hout, Wout)


# ---------------------------------------------------------------------------
# Pure-JAX f32 reference
# ---------------------------------------------------------------------------
def _reference(x, scale=4):
    N, C, H, W = x.shape
    a_h = bilinear_matrix(H, scale)
    a_w = bilinear_matrix(W, scale)
    up = jnp.einsum('ip,jq,ncpq->ncij', a_h, a_w, x,
                    precision=jax.lax.Precision.HIGHEST)
    return jax.nn.softmax(up, axis=1)


if __name__ == "__main__":
    # Small stand-in for (N, num_class, H, W) class-logit maps.
    N, C, H, W = 2, 19, 16, 16
    key = jax.random.PRNGKey(0)
    x = jax.random.normal(key, (N, C, H, W), jnp.float32)

    # tile_h=8 exercises the multi-tile halo path (interior + edge tiles).
    out = c1_8090_forward(x, tile_h=8)
    out = jax.block_until_ready(out)

    ref = jax.block_until_ready(_reference(x))

    assert out.shape == (N, C, 4 * H, 4 * W), out.shape
    out_f32 = out.astype(jnp.float32)
    err = float(jnp.max(jnp.abs(out_f32 - ref)))
    assert err < 3e-2, err                                    # bf16 matmul operand + bf16 output
    row_sum_err = float(jnp.max(jnp.abs(jnp.sum(out_f32, axis=1) - 1.0)))
    assert row_sum_err < 2e-2, row_sum_err                    # approx reciprocal + bf16 rounding
    print("KERNEL_OK")
</pallas_src>

<mosaic_0001>
module attributes {stable_mosaic.version = 11 : i64} {
  func.func @_upsample_softmax_kernel(%arg0: i32, %arg1: i32, %arg2: memref<1x19x18x16xf32, #tpu.memory_space<vmem>>, %arg3: memref<16x64xbf16, #tpu.memory_space<vmem>>, %arg4: memref<1x19x8x256xbf16, #tpu.memory_space<vmem>>) attributes {dimension_semantics = [#tpu.dimension_semantics<parallel>, #tpu.dimension_semantics<parallel>], iteration_bounds = array<i64: 2, 2>, scalar_prefetch = 0 : i64, scratch_operands = 0 : i64, tpu.core_type = #tpu.core_type<tc>, window_params = [{transform_indices = @transform_0, window_bounds = array<i64: 1, 19, 18, 16>}, {pipeline_mode = #tpu.pipeline_mode<synchronous>, transform_indices = @transform_1, window_bounds = array<i64: 16, 64>}, {transform_indices = @transform_2, window_bounds = array<i64: 1, 19, 8, 256>}]} {
    %c8_i32 = arith.constant 8 : i32
    %0 = arith.muli %arg1, %c8_i32 : i32
    %1 = tpu.assume_multiple %0, 8 : i32
    %c0 = arith.constant 0 : index
    %c0_0 = arith.constant 0 : index
    %2 = arith.index_cast %1 : i32 to index
    %c0_1 = arith.constant 0 : index
    %3 = vector.load %arg2[%c0, %c0_0, %2, %c0_1] : memref<1x19x18x16xf32, #tpu.memory_space<vmem>>, vector<1x19x10x16xf32>
    %4 = vector.shape_cast %3 : vector<1x19x10x16xf32> to vector<19x10x16xf32>
    %5 = vector.extract_strided_slice %4 {offsets = [0, 0, 0], sizes = [19, 8, 16], strides = [1, 1, 1]} : vector<19x10x16xf32> to vector<19x8x16xf32>
    %6 = vector.extract_strided_slice %4 {offsets = [0, 1, 0], sizes = [19, 8, 16], strides = [1, 1, 1]} : vector<19x10x16xf32> to vector<19x8x16xf32>
    %7 = vector.extract_strided_slice %4 {offsets = [0, 2, 0], sizes = [19, 8, 16], strides = [1, 1, 1]} : vector<19x10x16xf32> to vector<19x8x16xf32>
    %c0_2 = arith.constant 0 : index
    %c0_3 = arith.constant 0 : index
    %8 = vector.load %arg3[%c0_2, %c0_3] : memref<16x64xbf16, #tpu.memory_space<vmem>>, vector<16x64xbf16>
    %cst = arith.constant 3.750000e-01 : f32
    %9 = vector.broadcast %cst : f32 to vector<19x8x16xf32>
    %10 = arith.mulf %9, %5 : vector<19x8x16xf32>
    %cst_4 = arith.constant 6.250000e-01 : f32
    %11 = vector.broadcast %cst_4 : f32 to vector<19x8x16xf32>
    %12 = arith.mulf %11, %6 : vector<19x8x16xf32>
    %13 = arith.addf %10, %12 : vector<19x8x16xf32>
    %14 = vector.shape_cast %13 : vector<19x8x16xf32> to vector<152x16xf32>
    %15 = arith.truncf %14 : vector<152x16xf32> to vector<152x16xbf16>
    %cst_5 = arith.constant dense<0.000000e+00> : vector<152x64xf32>
    %16 = tpu.matmul %15, %8, %cst_5 {dimension_numbers = #tpu.dot_dimension_numbers<[1], [0], [0], [1], [0, 0, 1, 1], [], []>} : vector<152x16xbf16>, vector<16x64xbf16>, vector<152x64xf32> -> vector<152x64xf32>
    %17 = vector.shape_cast %16 : vector<152x64xf32> to vector<19x8x64xf32>
    %cst_6 = arith.constant dense<0xFF800000> : vector<8x64xf32>
    %18 = vector.multi_reduction <maximumf>, %17, %cst_6 [0] : vector<19x8x64xf32> to vector<8x64xf32>
    %19 = vector.shape_cast %18 : vector<8x64xf32> to vector<1x8x64xf32>
    %20 = vector.broadcast %19 : vector<1x8x64xf32> to vector<19x8x64xf32>
    %21 = arith.subf %17, %20 : vector<19x8x64xf32>
    %22 = math.exp %21 : vector<19x8x64xf32>
    %cst_7 = arith.constant dense<0.000000e+00> : vector<8x64xf32>
    %23 = vector.multi_reduction <add>, %22, %cst_7 [0] : vector<19x8x64xf32> to vector<8x64xf32>
    %24 = vector.shape_cast %23 : vector<8x64xf32> to vector<1x8x64xf32>
    %25 = tpu.reciprocal %24 {approx = true} : vector<1x8x64xf32> -> vector<1x8x64xf32>
    %26 = vector.broadcast %25 : vector<1x8x64xf32> to vector<19x8x64xf32>
    %27 = arith.mulf %22, %26 : vector<19x8x64xf32>
    %28 = arith.truncf %27 : vector<19x8x64xf32> to vector<19x8x64xbf16>
    %c0_8 = arith.constant 0 : index
    %c0_9 = arith.constant 0 : index
    %c0_10 = arith.constant 0 : index
    %c0_11 = arith.constant 0 : index
    %29 = vector.load %arg4[%c0_8, %c0_9, %c0_10, %c0_11] : memref<1x19x8x256xbf16, #tpu.memory_space<vmem>>, vector<1x19x8x64xbf16>
    %30 = vector.shape_cast %29 : vector<1x19x8x64xbf16> to vector<19x8x64xbf16>
    %31 = vector.shape_cast %28 : vector<19x8x64xbf16> to vector<1x19x8x64xbf16>
    tpu.vector_store %arg4[%c0_8, %c0_9, %c0_10, %c0_11], %31 {strides = array<i32>} : memref<1x19x8x256xbf16, #tpu.memory_space<vmem>>, vector<1x19x8x64xbf16>,
    %cst_12 = arith.constant 1.250000e-01 : f32
    %32 = vector.broadcast %cst_12 : f32 to vector<19x8x16xf32>
    %33 = arith.mulf %32, %5 : vector<19x8x16xf32>
    %cst_13 = arith.constant 8.750000e-01 : f32
    %34 = vector.broadcast %cst_13 : f32 to vector<19x8x16xf32>
    %35 = arith.mulf %34, %6 : vector<19x8x16xf32>
    %36 = arith.addf %33, %35 : vector<19x8x16xf32>
    %37 = vector.shape_cast %36 : vector<19x8x16xf32> to vector<152x16xf32>
    %38 = arith.truncf %37 : vector<152x16xf32> to vector<152x16xbf16>
    %cst_14 = arith.constant dense<0.000000e+00> : vector<152x64xf32>
    %39 = tpu.matmul %38, %8, %cst_14 {dimension_numbers = #tpu.dot_dimension_numbers<[1], [0], [0], [1], [0, 0, 1, 1], [], []>} : vector<152x16xbf16>, vector<16x64xbf16>, vector<152x64xf32> -> vector<152x64xf32>
    %40 = vector.shape_cast %39 : vector<152x64xf32> to vector<19x8x64xf32>
    %cst_15 = arith.constant dense<0xFF800000> : vector<8x64xf32>
    %41 = vector.multi_reduction <maximumf>, %40, %cst_15 [0] : vector<19x8x64xf32> to vector<8x64xf32>
    %42 = vector.shape_cast %41 : vector<8x64xf32> to vector<1x8x64xf32>
    %43 = vector.broadcast %42 : vector<1x8x64xf32> to vector<19x8x64xf32>
    %44 = arith.subf %40, %43 : vector<19x8x64xf32>
    %45 = math.exp %44 : vector<19x8x64xf32>
    %cst_16 = arith.constant dense<0.000000e+00> : vector<8x64xf32>
    %46 = vector.multi_reduction <add>, %45, %cst_16 [0] : vector<19x8x64xf32> to vector<8x64xf32>
    %47 = vector.shape_cast %46 : vector<8x64xf32> to vector<1x8x64xf32>
    %48 = tpu.reciprocal %47 {approx = true} : vector<1x8x64xf32> -> vector<1x8x64xf32>
    %49 = vector.broadcast %48 : vector<1x8x64xf32> to vector<19x8x64xf32>
    %50 = arith.mulf %45, %49 : vector<19x8x64xf32>
    %51 = arith.truncf %50 : vector<19x8x64xf32> to vector<19x8x64xbf16>
    %c0_17 = arith.constant 0 : index
    %c0_18 = arith.constant 0 : index
    %c0_19 = arith.constant 0 : index
    %c64 = arith.constant 64 : index
    %52 = vector.load %arg4[%c0_17, %c0_18, %c0_19, %c64] : memref<1x19x8x256xbf16, #tpu.memory_space<vmem>>, vector<1x19x8x64xbf16>
    %53 = vector.shape_cast %52 : vector<1x19x8x64xbf16> to vector<19x8x64xbf16>
    %54 = vector.shape_cast %51 : vector<19x8x64xbf16> to vector<1x19x8x64xbf16>
    tpu.vector_store %arg4[%c0_17, %c0_18, %c0_19, %c64], %54 {strides = array<i32>} : memref<1x19x8x256xbf16, #tpu.memory_space<vmem>>, vector<1x19x8x64xbf16>,
    %cst_20 = arith.constant 8.750000e-01 : f32
    %55 = vector.broadcast %cst_20 : f32 to vector<19x8x16xf32>
    %56 = arith.mulf %55, %6 : vector<19x8x16xf32>
    %cst_21 = arith.constant 1.250000e-01 : f32
    %57 = vector.broadcast %cst_21 : f32 to vector<19x8x16xf32>
    %58 = arith.mulf %57, %7 : vector<19x8x16xf32>
    %59 = arith.addf %56, %58 : vector<19x8x16xf32>
    %60 = vector.shape_cast %59 : vector<19x8x16xf32> to vector<152x16xf32>
    %61 = arith.truncf %60 : vector<152x16xf32> to vector<152x16xbf16>
    %cst_22 = arith.constant dense<0.000000e+00> : vector<152x64xf32>
    %62 = tpu.matmul %61, %8, %cst_22 {dimension_numbers = #tpu.dot_dimension_numbers<[1], [0], [0], [1], [0, 0, 1, 1], [], []>} : vector<152x16xbf16>, vector<16x64xbf16>, vector<152x64xf32> -> vector<152x64xf32>
    %63 = vector.shape_cast %62 : vector<152x64xf32> to vector<19x8x64xf32>
    %cst_23 = arith.constant dense<0xFF800000> : vector<8x64xf32>
    %64 = vector.multi_reduction <maximumf>, %63, %cst_23 [0] : vector<19x8x64xf32> to vector<8x64xf32>
    %65 = vector.shape_cast %64 : vector<8x64xf32> to vector<1x8x64xf32>
    %66 = vector.broadcast %65 : vector<1x8x64xf32> to vector<19x8x64xf32>
    %67 = arith.subf %63, %66 : vector<19x8x64xf32>
    %68 = math.exp %67 : vector<19x8x64xf32>
    %cst_24 = arith.constant dense<0.000000e+00> : vector<8x64xf32>
    %69 = vector.multi_reduction <add>, %68, %cst_24 [0] : vector<19x8x64xf32> to vector<8x64xf32>
    %70 = vector.shape_cast %69 : vector<8x64xf32> to vector<1x8x64xf32>
    %71 = tpu.reciprocal %70 {approx = true} : vector<1x8x64xf32> -> vector<1x8x64xf32>
    %72 = vector.broadcast %71 : vector<1x8x64xf32> to vector<19x8x64xf32>
    %73 = arith.mulf %68, %72 : vector<19x8x64xf32>
    %74 = arith.truncf %73 : vector<19x8x64xf32> to vector<19x8x64xbf16>
    %c0_25 = arith.constant 0 : index
    %c0_26 = arith.constant 0 : index
    %c0_27 = arith.constant 0 : index
    %c128 = arith.constant 128 : index
    %75 = vector.load %arg4[%c0_25, %c0_26, %c0_27, %c128] : memref<1x19x8x256xbf16, #tpu.memory_space<vmem>>, vector<1x19x8x64xbf16>
    %76 = vector.shape_cast %75 : vector<1x19x8x64xbf16> to vector<19x8x64xbf16>
    %77 = vector.shape_cast %74 : vector<19x8x64xbf16> to vector<1x19x8x64xbf16>
    tpu.vector_store %arg4[%c0_25, %c0_26, %c0_27, %c128], %77 {strides = array<i32>} : memref<1x19x8x256xbf16, #tpu.memory_space<vmem>>, vector<1x19x8x64xbf16>,
    %cst_28 = arith.constant 6.250000e-01 : f32
    %78 = vector.broadcast %cst_28 : f32 to vector<19x8x16xf32>
    %79 = arith.mulf %78, %6 : vector<19x8x16xf32>
    %cst_29 = arith.constant 3.750000e-01 : f32
    %80 = vector.broadcast %cst_29 : f32 to vector<19x8x16xf32>
    %81 = arith.mulf %80, %7 : vector<19x8x16xf32>
    %82 = arith.addf %79, %81 : vector<19x8x16xf32>
    %83 = vector.shape_cast %82 : vector<19x8x16xf32> to vector<152x16xf32>
    %84 = arith.truncf %83 : vector<152x16xf32> to vector<152x16xbf16>
    %cst_30 = arith.constant dense<0.000000e+00> : vector<152x64xf32>
    %85 = tpu.matmul %84, %8, %cst_30 {dimension_numbers = #tpu.dot_dimension_numbers<[1], [0], [0], [1], [0, 0, 1, 1], [], []>} : vector<152x16xbf16>, vector<16x64xbf16>, vector<152x64xf32> -> vector<152x64xf32>
    %86 = vector.shape_cast %85 : vector<152x64xf32> to vector<19x8x64xf32>
    %cst_31 = arith.constant dense<0xFF800000> : vector<8x64xf32>
    %87 = vector.multi_reduction <maximumf>, %86, %cst_31 [0] : vector<19x8x64xf32> to vector<8x64xf32>
    %88 = vector.shape_cast %87 : vector<8x64xf32> to vector<1x8x64xf32>
    %89 = vector.broadcast %88 : vector<1x8x64xf32> to vector<19x8x64xf32>
    %90 = arith.subf %86, %89 : vector<19x8x64xf32>
    %91 = math.exp %90 : vector<19x8x64xf32>
    %cst_32 = arith.constant dense<0.000000e+00> : vector<8x64xf32>
    %92 = vector.multi_reduction <add>, %91, %cst_32 [0] : vector<19x8x64xf32> to vector<8x64xf32>
    %93 = vector.shape_cast %92 : vector<8x64xf32> to vector<1x8x64xf32>
    %94 = tpu.reciprocal %93 {approx = true} : vector<1x8x64xf32> -> vector<1x8x64xf32>
    %95 = vector.broadcast %94 : vector<1x8x64xf32> to vector<19x8x64xf32>
    %96 = arith.mulf %91, %95 : vector<19x8x64xf32>
    %97 = arith.truncf %96 : vector<19x8x64xf32> to vector<19x8x64xbf16>
    %c0_33 = arith.constant 0 : index
    %c0_34 = arith.constant 0 : index
    %c0_35 = arith.constant 0 : index
    %c192 = arith.constant 192 : index
    %98 = vector.load %arg4[%c0_33, %c0_34, %c0_35, %c192] : memref<1x19x8x256xbf16, #tpu.memory_space<vmem>>, vector<1x19x8x64xbf16>
    %99 = vector.shape_cast %98 : vector<1x19x8x64xbf16> to vector<19x8x64xbf16>
    %100 = vector.shape_cast %97 : vector<19x8x64xbf16> to vector<1x19x8x64xbf16>
    tpu.vector_store %arg4[%c0_33, %c0_34, %c0_35, %c192], %100 {strides = array<i32>} : memref<1x19x8x256xbf16, #tpu.memory_space<vmem>>, vector<1x19x8x64xbf16>,
    return
  }
  func.func @transform_0(%arg0: i32, %arg1: i32) -> (i32, i32, i32, i32) {
    %c0_i32 = arith.constant 0 : i32
    %c0_i32_0 = arith.constant 0 : i32
    %c0_i32_1 = arith.constant 0 : i32
    %c0_i32_2 = arith.constant 0 : i32
    return %arg0, %c0_i32, %c0_i32_0, %c0_i32_1 : i32, i32, i32, i32
  }
  func.func @transform_1(%arg0: i32, %arg1: i32) -> (i32, i32) {
    %c0_i32 = arith.constant 0 : i32
    %c0_i32_0 = arith.constant 0 : i32
    %c0_i32_1 = arith.constant 0 : i32
    return %c0_i32, %c0_i32_0 : i32, i32
  }
  func.func @transform_2(%arg0: i32, %arg1: i32) -> (i32, i32, i32, i32) {
    %c0_i32 = arith.constant 0 : i32
    %c0_i32_0 = arith.constant 0 : i32
    %c0_i32_1 = arith.constant 0 : i32
    return %arg0, %c0_i32, %arg1, %c0_i32_0 : i32, i32, i32, i32
  }
}

</mosaic_0001>

<llo_original>
// kernel: tpu_custom_call.1
$region0: #{tpu_custom_call.1}
  #allocation0 [shape = 'u32[]', space=smem, size = 0x4, offset = 0x4, fixed_abs, tag = 'smem constant byte address 0x4 - core index']
  #allocation1 [shape = 'u32[72,128]{1,0:T(1,128)}', space=vmem, size = 0x9000, scoped, tag = 'internal scratch']
  %s0 = inlined_call_operand.vmem [shape: f32[2,19,18,16], index: 0, kind: input, shape index: {}]
  %s1 = inlined_call_operand.vmem [shape: bf16[16,64], index: 1, kind: input, shape index: {}]
  %s2 = inlined_call_operand.hbm [shape: bf16[2,19,16,256], index: 2, kind: output, shape index: {}]
  %s3 = sld [smem:[#allocation0]]
  $region41: #{tpu_custom_call.1} parent=0
    _
  %s5 = ssub.s32 1, %s3
  %s6 = scalar_select 0, %s5, %s3
  $region1: #{tpu_custom_call.1} parent=0
    #allocation2 [shape = 'u8[155648]{0}', space=vmem, size = 0x26000, scoped, tag = 'output window, operand 0']
    #allocation3 [shape = 's32[2]{0}', space=sflag, size = 0x8, scoped, tag = 'scoped memory for tpu_custom_call.1']
    %7 = vsyncpa [#allocation3], 0
    %s8 = scalar_lea.sflag [#allocation3], 1
    %9 = vsyncpa %s8, 0
    loop: start=0, step=1, limit=6
    $region2: #{tpu_custom_call.1} parent=1 // loop_pre_header
      _
    $region3: #{tpu_custom_call.1} parent=1 // loop_header
      %s11 = sphi 0, %s15
      %p12 = scmp.ge.s32.totalorder %s11, 6
      %s18 = sphi 0, %s30
      %s19 = sphi 0, %s26
      %s20 = sphi 0, %s18
      %s21 = sphi 0, %s19
      %s22 = sphi 0, %s20
      %s23 = sphi 0, %s21
      %s33 = sphi 0, %s35
      %s36 = sphi 0, %s33
      %s37 = sphi 0, %s36
      %s53 = sphi 0, %s37
      %s57 = sphi 0, %s57
      %s59 = sphi 0, %s57
      %s60 = sphi 0, %s59
      %s74 = sphi 0, %s60
      %s82 = sphi 0, %s84
      %s85 = sphi 0, %s82
      %s86 = sphi 0, %s85
      %s102 = sphi 0, %s86
    $region4: #{tpu_custom_call.1} parent=1 // loop_header_branch
      %14 = sbr.rel (%p12) target = $region8
    $region5: #{tpu_custom_call.1} parent=1 // loop_body
      %s16 = ssub.s32 %s11, 1
      %s17 = ssub.s32 %s11, 2
      %s24 = sadd.s32 1, %s19
      %p25 = scmp.ge.s32.totalorder %s24, 2
      %s26 = scalar_select %p25, 0, %s24
      %s27 = sadd.s32 1, %s18
      %s28 = scalar_select %p25, %s27, %s18
      %p29 = scmp.ge.s32.totalorder %s28, 2
      %s30 = scalar_select %p29, 0, %s28
      %s31 = ssub.s32 %s18, %s30
      %p32 = scmp.eq.s32.totalorder %s31, 0
      %s34 = sadd.s32 %s33, 1
      %s35 = scalar_select %p32, %s33, %s34
      %p38 = pneg %p32
      %p39 = scmp.eq.s32.totalorder %s11, 3
      %p40 = por %p38, %p39
      %p41 = scmp.ne.s32.totalorder %s33, %s36
      %p42 = scmp.eq.s32.totalorder %s11, 0
      %p43 = por %p41, %p42
      %p44 = scmp.ne.s32.totalorder %s33, %s36
      %p45 = scmp.eq.s32.totalorder %s16, 3
      %p46 = por %p44, %p45
      %p47 = scmp.ne.s32.totalorder %s36, %s37
      %p48 = scmp.eq.s32.totalorder %s16, 0
      %p49 = por %p47, %p48
      %p50 = scmp.ne.s32.totalorder %s36, %s37
      %p51 = scmp.eq.s32.totalorder %s17, 3
      %p52 = por %p50, %p51
      %p54 = scmp.ne.s32.totalorder %s37, %s53
      %p55 = scmp.eq.s32.totalorder %s17, 0
      %p56 = por %p54, %p55
      %s58 = sadd.s32 %s57, 1
      %p61 = scmp.eq.s32.totalorder %s11, 3
      %p62 = scmp.ne.s32.totalorder %s57, %s59
      %p63 = scmp.eq.s32.totalorder %s11, 0
      %p64 = por %p62, %p63
      %p65 = scmp.ne.s32.totalorder %s57, %s59
      %p66 = scmp.eq.s32.totalorder %s16, 3
      %p67 = por %p65, %p66
      %p68 = scmp.ne.s32.totalorder %s59, %s60
      %p69 = scmp.eq.s32.totalorder %s16, 0
      %p70 = por %p68, %p69
      %p71 = scmp.ne.s32.totalorder %s59, %s60
      %p72 = scmp.eq.s32.totalorder %s17, 3
      %p73 = por %p71, %p72
      %p75 = scmp.ne.s32.totalorder %s60, %s74
      %p76 = scmp.eq.s32.totalorder %s17, 0
      %p77 = por %p75, %p76
      %s78 = ssub.s32 %s18, %s30
      %s79 = ssub.s32 %s19, %s26
      %s80 = sor.u32 %s78, %s79
      %p81 = scmp.eq.s32.totalorder %s80, 0
      %s83 = sadd.s32 %s82, 1
      %s84 = scalar_select %p81, %s82, %s83
      %p87 = pneg %p81
      %p88 = scmp.eq.s32.totalorder %s11, 3
      %p89 = por %p87, %p88
      %p90 = scmp.ne.s32.totalorder %s82, %s85
      %p91 = scmp.eq.s32.totalorder %s11, 0
      %p92 = por %p90, %p91
      %p93 = scmp.ne.s32.totalorder %s82, %s85
      %p94 = scmp.eq.s32.totalorder %s16, 3
      %p95 = por %p93, %p94
      %p96 = scmp.ne.s32.totalorder %s85, %s86
      %p97 = scmp.eq.s32.totalorder %s16, 0
      %p98 = por %p96, %p97
      %p99 = scmp.ne.s32.totalorder %s85, %s86
      %p100 = scmp.eq.s32.totalorder %s17, 3
      %p101 = por %p99, %p100
      %p103 = scmp.ne.s32.totalorder %s86, %s102
      %p104 = scmp.eq.s32.totalorder %s17, 0
      %p105 = por %p103, %p104
      %p106 = scmp.le.s32.totalorder 1, %s11
      %p107 = scmp.lt.s32.totalorder %s11, 5
      %p108 = pnand %p106, %p107
      %p109 = pneg %p108
      // Predicated region
      $region9: #{tpu_custom_call.1} parent=5 // pred_check
        _
      $region10: #{tpu_custom_call.1} parent=5 // pred_check_branch
        %111 = sbr.rel (%p108) target = $region12
      $region11: #{tpu_custom_call.1} parent=5 // pred_region
        %s112 = ssub.s32 %s11, 1
        // Predicated region
        $region13: #{tpu_custom_call.1} parent=11 // pred_check
          %p113 = pneg %p70
        $region14: #{tpu_custom_call.1} parent=11 // pred_check_branch
          %115 = sbr.rel (%p113) target = $region16
        $region15: #{tpu_custom_call.1} parent=11 // pred_region
          _
        $region16: #{tpu_custom_call.1} parent=11 // pred_fallthru
          _
      $region12: #{tpu_custom_call.1} parent=5 // pred_fallthru
        _
      %p116 = scmp.lt.s32.totalorder %s11, 4
      // Predicated region
      $region17: #{tpu_custom_call.1} parent=5 // pred_check
        %p117 = pneg %p116
      $region18: #{tpu_custom_call.1} parent=5 // pred_check_branch
        %119 = sbr.rel (%p117) target = $region20
      $region19: #{tpu_custom_call.1} parent=5 // pred_region
        // Predicated region
        $region21: #{tpu_custom_call.1} parent=19 // pred_check
          %p120 = pneg %p43
        $region22: #{tpu_custom_call.1} parent=19 // pred_check_branch
          %122 = sbr.rel (%p120) target = $region24
        $region23: #{tpu_custom_call.1} parent=19 // pred_region
          %p123 = scmp.lt.s32.totalorder %s18, 1
          %s124 = scalar_select %p123, %s18, 1
          %s125 = smul.addr %s124, 57
          %s126 = smul.addr %s125, 8
          %s127 = scalar_lea.vmem %s0, %s126
        $region24: #{tpu_custom_call.1} parent=19 // pred_fallthru
          _
      $region20: #{tpu_custom_call.1} parent=5 // pred_fallthru
        _
      %p128 = scmp.le.s32.totalorder 1, %s11
      %p129 = scmp.lt.s32.totalorder %s11, 5
      %p130 = pnand %p128, %p129
      %p131 = pneg %p130
      // Predicated region
      $region25: #{tpu_custom_call.1} parent=5 // pred_check
        _
      $region26: #{tpu_custom_call.1} parent=5 // pred_check_branch
        %133 = sbr.rel (%p130) target = $region28
      $region27: #{tpu_custom_call.1} parent=5 // pred_region
        %s134 = ssub.s32 %s11, 1
        %p135 = scmp.lt.s32.totalorder %s20, 1
        %s136 = scalar_select %p135, %s20, 1
        %s137 = smul.addr %s136, 57
        %s138 = smul.addr %s137, 8
        %s139 = scalar_lea.vmem %s0, %s138
        %p140 = pneg %p49
        %p141 = pneg %p46
        %p142 = pneg %p70
        %p143 = pneg %p67
        %p144 = pneg %p98
        %p145 = pneg %p95
        %s146 = sand.u32 %s85, 1
        %s147 = scalar_lea.sflag [#allocation3], %s146
        %s148 = sand.u32 %s85, 1
        %s149 = smul.addr %s148, 152
        %s150 = scalar_lea.vmem [#allocation2], %s149
        %p151 = scmp.lt.s32.totalorder %s20, 1
        %s152 = scalar_select %p151, %s20, 1
        %s153 = smul.addr %s152, 57
        %s154 = smul.addr %s153, 8
        %s155 = scalar_lea.vmem %s0, %s154
        %s157 = smul.u32 %s21, 8
        %s158 = scalar_lea.vmem %s155, %s157
        %v159 = vld [vmem:[%s158] sm:$0xff]
        %v160 = vld [vmem:[%s158 + $0x8] sm:$0x3]
        %v161 = vld [vmem:[%s158 + $0x18] sm:$0xff]
        %v162 = vld [vmem:[%s158 + $0x20] sm:$0x3]
        %v163 = vld [vmem:[%s158 + $0x30] sm:$0xff]
        %v164 = vld [vmem:[%s158 + $0x38] sm:$0x3]
        %v165 = vld [vmem:[%s158 + $0x48] sm:$0xff]
        %v166 = vld [vmem:[%s158 + $0x50] sm:$0x3]
        %v167 = vld [vmem:[%s158 + $0x60] sm:$0xff]
        %v168 = vld [vmem:[%s158 + $0x68] sm:$0x3]
        %v169 = vld [vmem:[%s158 + $0x78] sm:$0xff]
        %v170 = vld [vmem:[%s158 + $0x80] sm:$0x3]
        %v171 = vld [vmem:[%s158 + $0x90] sm:$0xff]
        %v172 = vld [vmem:[%s158 + $0x98] sm:$0x3]
        %v173 = vld [vmem:[%s158 + $0xa8] sm:$0xff]
        %v174 = vld [vmem:[%s158 + $0xb0] sm:$0x3]
        %v175 = vld [vmem:[%s158 + $0xc0] sm:$0xff]
        %v176 = vld [vmem:[%s158 + $0xc8] sm:$0x3]
        %v177 = vld [vmem:[%s158 + $0xd8] sm:$0xff]
        %v178 = vld [vmem:[%s158 + $0xe0] sm:$0x3]
        %v179 = vld [vmem:[%s158 + $0xf0] sm:$0xff]
        %v180 = vld [vmem:[%s158 + $0xf8] sm:$0x3]
        %v181 = vld [vmem:[%s158 + $0x108] sm:$0xff]
        %v182 = vld [vmem:[%s158 + $0x110] sm:$0x3]
        %v183 = vld [vmem:[%s158 + $0x120] sm:$0xff]
        %v184 = vld [vmem:[%s158 + $0x128] sm:$0x3]
        %v185 = vld [vmem:[%s158 + $0x138] sm:$0xff]
        %v186 = vld [vmem:[%s158 + $0x140] sm:$0x3]
        %v187 = vld [vmem:[%s158 + $0x150] sm:$0xff]
        %v188 = vld [vmem:[%s158 + $0x158] sm:$0x3]
        %v189 = vld [vmem:[%s158 + $0x168] sm:$0xff]
        %v190 = vld [vmem:[%s158 + $0x170] sm:$0x3]
        %v191 = vld [vmem:[%s158 + $0x180] sm:$0xff]
        %v192 = vld [vmem:[%s158 + $0x188] sm:$0x3]
        %v193 = vld [vmem:[%s158 + $0x198] sm:$0xff]
        %v194 = vld [vmem:[%s158 + $0x1a0] sm:$0x3]
        %v195 = vld [vmem:[%s158 + $0x1b0] sm:$0xff]
        %v196 = vld [vmem:[%s158 + $0x1b8] sm:$0x3]
        %v197 = vld [vmem:[%s1] sm:$0xf]
        %v198 = vld [vmem:[%s1 + $0x4] sm:$0xf]
        %v199 = vmul.f32 %v159, 0.375
        %v200 = vmul.f32 %v161, 0.375
        %v201 = vmul.f32 %v163, 0.375
        %v202 = vmul.f32 %v165, 0.375
        %v203 = vmul.f32 %v167, 0.375
        %v204 = vmul.f32 %v169, 0.375
        %v205 = vmul.f32 %v171, 0.375
        %v206 = vmul.f32 %v173, 0.375
        %v207 = vmul.f32 %v175, 0.375
        %v208 = vmul.f32 %v177, 0.375
        %v209 = vmul.f32 %v179, 0.375
        %v210 = vmul.f32 %v181, 0.375
        %v211 = vmul.f32 %v183, 0.375
        %v212 = vmul.f32 %v185, 0.375
        %v213 = vmul.f32 %v187, 0.375
        %v214 = vmul.f32 %v189, 0.375
        %v215 = vmul.f32 %v191, 0.375
        %v216 = vmul.f32 %v193, 0.375
        %v217 = vmul.f32 %v195, 0.375
        %v218 = vmul.f32 %v159, 0.625
        %v219 = vmul.f32 %v160, 0.625
        %v220 = vmul.f32 %v161, 0.625
        %v221 = vmul.f32 %v162, 0.625
        %v222 = vmul.f32 %v163, 0.625
        %v223 = vmul.f32 %v164, 0.625
        %v224 = vmul.f32 %v165, 0.625
        %v225 = vmul.f32 %v166, 0.625
        %v226 = vmul.f32 %v167, 0.625
        %v227 = vmul.f32 %v168, 0.625
        %v228 = vmul.f32 %v169, 0.625
        %v229 = vmul.f32 %v170, 0.625
        %v230 = vmul.f32 %v171, 0.625
        %v231 = vmul.f32 %v172, 0.625
        %v232 = vmul.f32 %v173, 0.625
        %v233 = vmul.f32 %v174, 0.625
        %v234 = vmul.f32 %v175, 0.625
        %v235 = vmul.f32 %v176, 0.625
        %v236 = vmul.f32 %v177, 0.625
        %v237 = vmul.f32 %v178, 0.625
        %v238 = vmul.f32 %v179, 0.625
        %v239 = vmul.f32 %v180, 0.625
        %v240 = vmul.f32 %v181, 0.625
        %v241 = vmul.f32 %v182, 0.625
        %v242 = vmul.f32 %v183, 0.625
        %v243 = vmul.f32 %v184, 0.625
        %v244 = vmul.f32 %v185, 0.625
        %v245 = vmul.f32 %v186, 0.625
        %v246 = vmul.f32 %v187, 0.625
        %v247 = vmul.f32 %v188, 0.625
        %v248 = vmul.f32 %v189, 0.625
        %v249 = vmul.f32 %v190, 0.625
        %v250 = vmul.f32 %v191, 0.625
        %v251 = vmul.f32 %v192, 0.625
        %v252 = vmul.f32 %v193, 0.625
        %v253 = vmul.f32 %v194, 0.625
        %v254 = vmul.f32 %v195, 0.625
        %v255 = vmul.f32 %v196, 0.625
        %vm294 = vcmask 1046528
        %v295 = vrot.slane %v218, 1
        %v296 = vrot.slane %v219, 1
        %v297 = vsel %vm294, %v295, %v296
        %v298 = vrot.slane %v220, 1
        %v299 = vrot.slane %v221, 1
        %v300 = vsel %vm294, %v298, %v299
        %v301 = vrot.slane %v222, 1
        %v302 = vrot.slane %v223, 1
        %v303 = vsel %vm294, %v301, %v302
        %v304 = vrot.slane %v224, 1
        %v305 = vrot.slane %v225, 1
        %v306 = vsel %vm294, %v304, %v305
        %v307 = vrot.slane %v226, 1
        %v308 = vrot.slane %v227, 1
        %v309 = vsel %vm294, %v307, %v308
        %v310 = vrot.slane %v228, 1
        %v311 = vrot.slane %v229, 1
        %v312 = vsel %vm294, %v310, %v311
        %v313 = vrot.slane %v230, 1
        %v314 = vrot.slane %v231, 1
        %v315 = vsel %vm294, %v313, %v314
        %v316 = vrot.slane %v232, 1
        %v317 = vrot.slane %v233, 1
        %v318 = vsel %vm294, %v316, %v317
        %v319 = vrot.slane %v234, 1
        %v320 = vrot.slane %v235, 1
        %v321 = vsel %vm294, %v319, %v320
        %v322 = vrot.slane %v236, 1
        %v323 = vrot.slane %v237, 1
        %v324 = vsel %vm294, %v322, %v323
        %v325 = vrot.slane %v238, 1
        %v326 = vrot.slane %v239, 1
        %v327 = vsel %vm294, %v325, %v326
        %v328 = vrot.slane %v240, 1
        %v329 = vrot.slane %v241, 1
        %v330 = vsel %vm294, %v328, %v329
        %v331 = vrot.slane %v242, 1
        %v332 = vrot.slane %v243, 1
        %v333 = vsel %vm294, %v331, %v332
        %v334 = vrot.slane %v244, 1
        %v335 = vrot.slane %v245, 1
        %v336 = vsel %vm294, %v334, %v335
        %v337 = vrot.slane %v246, 1
        %v338 = vrot.slane %v247, 1
        %v339 = vsel %vm294, %v337, %v338
        %v340 = vrot.slane %v248, 1
        %v341 = vrot.slane %v249, 1
        %v342 = vsel %vm294, %v340, %v341
        %v343 = vrot.slane %v250, 1
        %v344 = vrot.slane %v251, 1
        %v345 = vsel %vm294, %v343, %v344
        %v346 = vrot.slane %v252, 1
        %v347 = vrot.slane %v253, 1
        %v348 = vsel %vm294, %v346, %v347
        %v349 = vrot.slane %v254, 1
        %v350 = vrot.slane %v255, 1
        %v351 = vsel %vm294, %v349, %v350
        %v371 = vadd.f32 %v199, %v297
        %v372 = vadd.f32 %v200, %v300
        %v373 = vadd.f32 %v201, %v303
        %v374 = vadd.f32 %v202, %v306
        %v375 = vadd.f32 %v203, %v309
        %v376 = vadd.f32 %v204, %v312
        %v377 = vadd.f32 %v205, %v315
        %v378 = vadd.f32 %v206, %v318
        %v379 = vadd.f32 %v207, %v321
        %v380 = vadd.f32 %v208, %v324
        %v381 = vadd.f32 %v209, %v327
        %v382 = vadd.f32 %v210, %v330
        %v383 = vadd.f32 %v211, %v333
        %v384 = vadd.f32 %v212, %v336
        %v385 = vadd.f32 %v213, %v339
        %v386 = vadd.f32 %v214, %v342
        %v387 = vadd.f32 %v215, %v345
        %v388 = vadd.f32 %v216, %v348
        %v389 = vadd.f32 %v217, %v351
        %v390 = vpack.c.bf16 %v372, %v371
        %v391 = vpack.c.bf16 %v374, %v373
        %v392 = vpack.c.bf16 %v376, %v375
        %v393 = vpack.c.bf16 %v378, %v377
        %v394 = vpack.c.bf16 %v380, %v379
        %v395 = vpack.c.bf16 %v382, %v381
        %v396 = vpack.c.bf16 %v384, %v383
        %v397 = vpack.c.bf16 %v386, %v385
        %v398 = vpack.c.bf16 %v388, %v387
        %v399 = vpack.c.bf16 %v389, %v389
        %v402 = vunpack.c.l.b16 %v197
        %v403 = vunpack.c.l.b16 %v198
        %v404 = vpack.c.b16 %v403, %v402
        %vm406 = vcmask 130048
        %v408 = vsel %vm406, %v390, 0
        %v411 = vsel %vm406, %v391, 0
        %v414 = vsel %vm406, %v392, 0
        %v417 = vsel %vm406, %v393, 0
        %v420 = vsel %vm406, %v394, 0
        %v423 = vsel %vm406, %v395, 0
        %v426 = vsel %vm406, %v396, 0
        %v429 = vsel %vm406, %v397, 0
        %v432 = vsel %vm406, %v398, 0
        %v435 = vsel %vm406, %v399, 0
        %437 = vmatpush.bf16.msra.mxu0 0
        %438 = vmatpush.bf16.msra.mxu0 0
        %439 = vmatpush.bf16.msra.mxu0 0
        %440 = vmatpush.bf16.msra.mxu0 0
        %441 = vmatpush.bf16.msra.mxu0 0
        %442 = vmatpush.bf16.msra.mxu0 0
        %443 = vmatpush.bf16.msra.mxu0 0
        %444 = vmatpush.bf16.msra.mxu0 %v404
        %445 = vmatmul.bf16.gmra.mxu0 %v408
        %v446 = vpop.f32.mrf.mxu0
        %v447 = vadd.f32 0.0, %v446
        %v448 = vpop.f32.mrf.mxu0
        %v449 = vadd.f32 0.0, %v448
        %450 = vmatmul.bf16.gmra.mxu0 %v411
        %v451 = vpop.f32.mrf.mxu0
        %v452 = vadd.f32 0.0, %v451
        %v453 = vpop.f32.mrf.mxu0
        %v454 = vadd.f32 0.0, %v453
        %455 = vmatmul.bf16.gmra.mxu0 %v414
        %v456 = vpop.f32.mrf.mxu0
        %v457 = vadd.f32 0.0, %v456
        %v458 = vpop.f32.mrf.mxu0
        %v459 = vadd.f32 0.0, %v458
        %460 = vmatmul.bf16.gmra.mxu0 %v417
        %v461 = vpop.f32.mrf.mxu0
        %v462 = vadd.f32 0.0, %v461
        %v463 = vpop.f32.mrf.mxu0
        %v464 = vadd.f32 0.0, %v463
        %465 = vmatmul.bf16.gmra.mxu0 %v420
        %v466 = vpop.f32.mrf.mxu0
        %v467 = vadd.f32 0.0, %v466
        %v468 = vpop.f32.mrf.mxu0
        %v469 = vadd.f32 0.0, %v468
        %470 = vmatmul.bf16.gmra.mxu0 %v423
        %v471 = vpop.f32.mrf.mxu0
        %v472 = vadd.f32 0.0, %v471
        %v473 = vpop.f32.mrf.mxu0
        %v474 = vadd.f32 0.0, %v473
        %475 = vmatmul.bf16.gmra.mxu0 %v426
        %v476 = vpop.f32.mrf.mxu0
        %v477 = vadd.f32 0.0, %v476
        %v478 = vpop.f32.mrf.mxu0
        %v479 = vadd.f32 0.0, %v478
        %480 = vmatmul.bf16.gmra.mxu0 %v429
        %v481 = vpop.f32.mrf.mxu0
        %v482 = vadd.f32 0.0, %v481
        %v483 = vpop.f32.mrf.mxu0
        %v484 = vadd.f32 0.0, %v483
        %485 = vmatmul.bf16.gmra.mxu0 %v432
        %v486 = vpop.f32.mrf.mxu0
        %v487 = vadd.f32 0.0, %v486
        %v488 = vpop.f32.mrf.mxu0
        %v489 = vadd.f32 0.0, %v488
        %490 = vmatmul.bf16.gmra.mxu0 %v435
        %v491 = vpop.f32.mrf.mxu0
        %v492 = vadd.f32 0.0, %v491
        %v493 = vpop.f32.mrf.mxu0
        %494 = vdwg.mxu0
        %vm495 = vcmask 523264
        %v496 = vsel %vm495, %v447, -inf
        %v497 = vsel %vm495, %v449, -inf
        %v498 = vsel %vm495, %v452, -inf
        %v499 = vsel %vm495, %v454, -inf
        %v500 = vsel %vm495, %v457, -inf
        %v501 = vmax.f32 %v496, %v500
        %v502 = vsel %vm495, %v459, -inf
        %v503 = vmax.f32 %v497, %v502
        %v504 = vsel %vm495, %v462, -inf
        %v505 = vmax.f32 %v498, %v504
        %v506 = vsel %vm495, %v464, -inf
        %v507 = vmax.f32 %v499, %v506
        %v508 = vsel %vm495, %v467, -inf
        %v509 = vmax.f32 %v501, %v508
        %v510 = vsel %vm495, %v469, -inf
        %v511 = vmax.f32 %v503, %v510
        %v512 = vsel %vm495, %v472, -inf
        %v513 = vmax.f32 %v505, %v512
        %v514 = vsel %vm495, %v474, -inf
        %v515 = vmax.f32 %v507, %v514
        %v516 = vsel %vm495, %v477, -inf
        %v517 = vmax.f32 %v509, %v516
        %v518 = vsel %vm495, %v479, -inf
        %v519 = vmax.f32 %v511, %v518
        %v520 = vsel %vm495, %v482, -inf
        %v521 = vmax.f32 %v513, %v520
        %v522 = vsel %vm495, %v484, -inf
        %v523 = vmax.f32 %v515, %v522
        %v524 = vsel %vm495, %v487, -inf
        %v525 = vmax.f32 %v517, %v524
        %v526 = vsel %vm495, %v489, -inf
        %v527 = vmax.f32 %v519, %v526
        %v528 = vsel %vm495, %v492, -inf
        %v529 = vmax.f32 %v521, %v528
        %v530 = vmax.f32 %v525, %v527
        %v531 = vmax.f32 %v529, %v523
        %v532 = vmax.f32 %v530, %v531
        %v533 = vsub.f32 %v447, %v532
        %v534 = vsub.f32 %v449, %v532
        %v535 = vsub.f32 %v452, %v532
        %v536 = vsub.f32 %v454, %v532
        %v537 = vsub.f32 %v457, %v532
        %v538 = vsub.f32 %v459, %v532
        %v539 = vsub.f32 %v462, %v532
        %v540 = vsub.f32 %v464, %v532
        %v541 = vsub.f32 %v467, %v532
        %v542 = vsub.f32 %v469, %v532
        %v543 = vsub.f32 %v472, %v532
        %v544 = vsub.f32 %v474, %v532
        %v545 = vsub.f32 %v477, %v532
        %v546 = vsub.f32 %v479, %v532
        %v547 = vsub.f32 %v482, %v532
        %v548 = vsub.f32 %v484, %v532
        %v549 = vsub.f32 %v487, %v532
        %v550 = vsub.f32 %v489, %v532
        %v551 = vsub.f32 %v492, %v532
        %v552 = vmul.f32 %v533, 1.442695
        %v553 = vpow.pop %v552
        %v554 = vmul.f32 %v534, 1.442695
        %v555 = vpow.pop %v554
        %v556 = vmul.f32 %v535, 1.442695
        %v557 = vpow.pop %v556
        %v558 = vmul.f32 %v536, 1.442695
        %v559 = vpow.pop %v558
        %v560 = vmul.f32 %v537, 1.442695
        %v561 = vpow.pop %v560
        %v562 = vmul.f32 %v538, 1.442695
        %v563 = vpow.pop %v562
        %v564 = vmul.f32 %v539, 1.442695
        %v565 = vpow.pop %v564
        %v566 = vmul.f32 %v540, 1.442695
        %v567 = vpow.pop %v566
        %v568 = vmul.f32 %v541, 1.442695
        %v569 = vpow.pop %v568
        %v570 = vmul.f32 %v542, 1.442695
        %v571 = vpow.pop %v570
        %v572 = vmul.f32 %v543, 1.442695
        %v573 = vpow.pop %v572
        %v574 = vmul.f32 %v544, 1.442695
        %v575 = vpow.pop %v574
        %v576 = vmul.f32 %v545, 1.442695
        %v577 = vpow.pop %v576
        %v578 = vmul.f32 %v546, 1.442695
        %v579 = vpow.pop %v578
        %v580 = vmul.f32 %v547, 1.442695
        %v581 = vpow.pop %v580
        %v582 = vmul.f32 %v548, 1.442695
        %v583 = vpow.pop %v582
        %v584 = vmul.f32 %v549, 1.442695
        %v585 = vpow.pop %v584
        %v586 = vmul.f32 %v550, 1.442695
        %v587 = vpow.pop %v586
        %v588 = vmul.f32 %v551, 1.442695
        %v589 = vpow.pop %v588
        %v590 = vsel %vm495, %v553, 0.0
        %v591 = vsel %vm495, %v555, 0.0
        %v592 = vadd.f32 %v590, %v591
        %v593 = vsel %vm495, %v557, 0.0
        %v594 = vadd.f32 %v592, %v593
        %v595 = vsel %vm495, %v559, 0.0
        %v596 = vadd.f32 %v594, %v595
        %v597 = vsel %vm495, %v561, 0.0
        %v598 = vadd.f32 %v596, %v597
        %v599 = vsel %vm495, %v563, 0.0
        %v600 = vadd.f32 %v598, %v599
        %v601 = vsel %vm495, %v565, 0.0
        %v602 = vadd.f32 %v600, %v601
        %v603 = vsel %vm495, %v567, 0.0
        %v604 = vadd.f32 %v602, %v603
        %v605 = vsel %vm495, %v569, 0.0
        %v606 = vadd.f32 %v604, %v605
        %v607 = vsel %vm495, %v571, 0.0
        %v608 = vadd.f32 %v606, %v607
        %v609 = vsel %vm495, %v573, 0.0
        %v610 = vadd.f32 %v608, %v609
        %v611 = vsel %vm495, %v575, 0.0
        %v612 = vadd.f32 %v610, %v611
        %v613 = vsel %vm495, %v577, 0.0
        %v614 = vadd.f32 %v612, %v613
        %v615 = vsel %vm495, %v579, 0.0
        %v616 = vadd.f32 %v614, %v615
        %v617 = vsel %vm495, %v581, 0.0
        %v618 = vadd.f32 %v616, %v617
        %v619 = vsel %vm495, %v583, 0.0
        %v620 = vadd.f32 %v618, %v619
        %v621 = vsel %vm495, %v585, 0.0
        %v622 = vadd.f32 %v620, %v621
        %v623 = vsel %vm495, %v587, 0.0
        %v624 = vadd.f32 %v622, %v623
        %v625 = vsel %vm495, %v589, 0.0
        %v626 = vadd.f32 %v624, %v625
        %v627 = vrcp.pop %v626
        %v628 = vmul.f32 %v553, %v627
        %v629 = vmul.f32 %v555, %v627
        %v630 = vmul.f32 %v557, %v627
        %v631 = vmul.f32 %v559, %v627
        %v632 = vmul.f32 %v561, %v627
        %v633 = vmul.f32 %v563, %v627
        %v634 = vmul.f32 %v565, %v627
        %v635 = vmul.f32 %v567, %v627
        %v636 = vmul.f32 %v569, %v627
        %v637 = vmul.f32 %v571, %v627
        %v638 = vmul.f32 %v573, %v627
        %v639 = vmul.f32 %v575, %v627
        %v640 = vmul.f32 %v577, %v627
        %v641 = vmul.f32 %v579, %v627
        %v642 = vmul.f32 %v581, %v627
        %v643 = vmul.f32 %v583, %v627
        %v644 = vmul.f32 %v585, %v627
        %v645 = vmul.f32 %v587, %v627
        %v646 = vmul.f32 %v589, %v627
        %v647 = vpack.c.bf16 %v628, %v628
        %v648 = vpack.c.bf16 %v629, %v629
        %v649 = vpack.c.bf16 %v630, %v630
        %v650 = vpack.c.bf16 %v631, %v631
        %v651 = vpack.c.bf16 %v632, %v632
        %v652 = vpack.c.bf16 %v633, %v633
        %v653 = vpack.c.bf16 %v634, %v634
        %v654 = vpack.c.bf16 %v635, %v635
        %v655 = vpack.c.bf16 %v636, %v636
        %v656 = vpack.c.bf16 %v637, %v637
        %v657 = vpack.c.bf16 %v638, %v638
        %v658 = vpack.c.bf16 %v639, %v639
        %v659 = vpack.c.bf16 %v640, %v640
        %v660 = vpack.c.bf16 %v641, %v641
        %v661 = vpack.c.bf16 %v642, %v642
        %v662 = vpack.c.bf16 %v643, %v643
        %v663 = vpack.c.bf16 %v644, %v644
        %v664 = vpack.c.bf16 %v645, %v645
        %v665 = vpack.c.bf16 %v646, %v646
        %vm666 = vcmask 519168
        %667 = vst.msk [vmem:[%s150] sm:$0xf] %vm666, %v647
        %668 = vst.msk [vmem:[%s150 + $0x8] sm:$0xf] %vm666, %v648
        %669 = vst.msk [vmem:[%s150 + $0x10] sm:$0xf] %vm666, %v649
        %670 = vst.msk [vmem:[%s150 + $0x18] sm:$0xf] %vm666, %v650
        %671 = vst.msk [vmem:[%s150 + $0x20] sm:$0xf] %vm666, %v651
        %672 = vst.msk [vmem:[%s150 + $0x28] sm:$0xf] %vm666, %v652
        %673 = vst.msk [vmem:[%s150 + $0x30] sm:$0xf] %vm666, %v653
        %674 = vst.msk [vmem:[%s150 + $0x38] sm:$0xf] %vm666, %v654
        %675 = vst.msk [vmem:[%s150 + $0x40] sm:$0xf] %vm666, %v655
        %676 = vst.msk [vmem:[%s150 + $0x48] sm:$0xf] %vm666, %v656
        %677 = vst.msk [vmem:[%s150 + $0x50] sm:$0xf] %vm666, %v657
        %678 = vst.msk [vmem:[%s150 + $0x58] sm:$0xf] %vm666, %v658
        %679 = vst.msk [vmem:[%s150 + $0x60] sm:$0xf] %vm666, %v659
        %680 = vst.msk [vmem:[%s150 + $0x68] sm:$0xf] %vm666, %v660
        %681 = vst.msk [vmem:[%s150 + $0x70] sm:$0xf] %vm666, %v661
        %682 = vst.msk [vmem:[%s150 + $0x78] sm:$0xf] %vm666, %v662
        %683 = vst.msk [vmem:[%s150 + $0x80] sm:$0xf] %vm666, %v663
        %684 = vst.msk [vmem:[%s150 + $0x88] sm:$0xf] %vm666, %v664
        %685 = vst.msk [vmem:[%s150 + $0x90] sm:$0xf] %vm666, %v665
        %v686 = vmul.f32 %v159, 0.125
        %v687 = vmul.f32 %v161, 0.125
        %v688 = vmul.f32 %v163, 0.125
        %v689 = vmul.f32 %v165, 0.125
        %v690 = vmul.f32 %v167, 0.125
        %v691 = vmul.f32 %v169, 0.125
        %v692 = vmul.f32 %v171, 0.125
        %v693 = vmul.f32 %v173, 0.125
        %v694 = vmul.f32 %v175, 0.125
        %v695 = vmul.f32 %v177, 0.125
        %v696 = vmul.f32 %v179, 0.125
        %v697 = vmul.f32 %v181, 0.125
        %v698 = vmul.f32 %v183, 0.125
        %v699 = vmul.f32 %v185, 0.125
        %v700 = vmul.f32 %v187, 0.125
        %v701 = vmul.f32 %v189, 0.125
        %v702 = vmul.f32 %v191, 0.125
        %v703 = vmul.f32 %v193, 0.125
        %v704 = vmul.f32 %v195, 0.125
        %v705 = vmul.f32 %v159, 0.875
        %v706 = vmul.f32 %v160, 0.875
        %v707 = vmul.f32 %v161, 0.875
        %v708 = vmul.f32 %v162, 0.875
        %v709 = vmul.f32 %v163, 0.875
        %v710 = vmul.f32 %v164, 0.875
        %v711 = vmul.f32 %v165, 0.875
        %v712 = vmul.f32 %v166, 0.875
        %v713 = vmul.f32 %v167, 0.875
        %v714 = vmul.f32 %v168, 0.875
        %v715 = vmul.f32 %v169, 0.875
        %v716 = vmul.f32 %v170, 0.875
        %v717 = vmul.f32 %v171, 0.875
        %v718 = vmul.f32 %v172, 0.875
        %v719 = vmul.f32 %v173, 0.875
        %v720 = vmul.f32 %v174, 0.875
        %v721 = vmul.f32 %v175, 0.875
        %v722 = vmul.f32 %v176, 0.875
        %v723 = vmul.f32 %v177, 0.875
        %v724 = vmul.f32 %v178, 0.875
        %v725 = vmul.f32 %v179, 0.875
        %v726 = vmul.f32 %v180, 0.875
        %v727 = vmul.f32 %v181, 0.875
        %v728 = vmul.f32 %v182, 0.875
        %v729 = vmul.f32 %v183, 0.875
        %v730 = vmul.f32 %v184, 0.875
        %v731 = vmul.f32 %v185, 0.875
        %v732 = vmul.f32 %v186, 0.875
        %v733 = vmul.f32 %v187, 0.875
        %v734 = vmul.f32 %v188, 0.875
        %v735 = vmul.f32 %v189, 0.875
        %v736 = vmul.f32 %v190, 0.875
        %v737 = vmul.f32 %v191, 0.875
        %v738 = vmul.f32 %v192, 0.875
        %v739 = vmul.f32 %v193, 0.875
        %v740 = vmul.f32 %v194, 0.875
        %v741 = vmul.f32 %v195, 0.875
        %v742 = vmul.f32 %v196, 0.875
        %v781 = vrot.slane %v705, 1
        %v782 = vrot.slane %v706, 1
        %v783 = vsel %vm294, %v781, %v782
        %v784 = vrot.slane %v707, 1
        %v785 = vrot.slane %v708, 1
        %v786 = vsel %vm294, %v784, %v785
        %v787 = vrot.slane %v709, 1
        %v788 = vrot.slane %v710, 1
        %v789 = vsel %vm294, %v787, %v788
        %v790 = vrot.slane %v711, 1
        %v791 = vrot.slane %v712, 1
        %v792 = vsel %vm294, %v790, %v791
        %v793 = vrot.slane %v713, 1
        %v794 = vrot.slane %v714, 1
        %v795 = vsel %vm294, %v793, %v794
        %v796 = vrot.slane %v715, 1
        %v797 = vrot.slane %v716, 1
        %v798 = vsel %vm294, %v796, %v797
        %v799 = vrot.slane %v717, 1
        %v800 = vrot.slane %v718, 1
        %v801 = vsel %vm294, %v799, %v800
        %v802 = vrot.slane %v719, 1
        %v803 = vrot.slane %v720, 1
        %v804 = vsel %vm294, %v802, %v803
        %v805 = vrot.slane %v721, 1
        %v806 = vrot.slane %v722, 1
        %v807 = vsel %vm294, %v805, %v806
        %v808 = vrot.slane %v723, 1
        %v809 = vrot.slane %v724, 1
        %v810 = vsel %vm294, %v808, %v809
        %v811 = vrot.slane %v725, 1
        %v812 = vrot.slane %v726, 1
        %v813 = vsel %vm294, %v811, %v812
        %v814 = vrot.slane %v727, 1
        %v815 = vrot.slane %v728, 1
        %v816 = vsel %vm294, %v814, %v815
        %v817 = vrot.slane %v729, 1
        %v818 = vrot.slane %v730, 1
        %v819 = vsel %vm294, %v817, %v818
        %v820 = vrot.slane %v731, 1
        %v821 = vrot.slane %v732, 1
        %v822 = vsel %vm294, %v820, %v821
        %v823 = vrot.slane %v733, 1
        %v824 = vrot.slane %v734, 1
        %v825 = vsel %vm294, %v823, %v824
        %v826 = vrot.slane %v735, 1
        %v827 = vrot.slane %v736, 1
        %v828 = vsel %vm294, %v826, %v827
        %v829 = vrot.slane %v737, 1
        %v830 = vrot.slane %v738, 1
        %v831 = vsel %vm294, %v829, %v830
        %v832 = vrot.slane %v739, 1
        %v833 = vrot.slane %v740, 1
        %v834 = vsel %vm294, %v832, %v833
        %v835 = vrot.slane %v741, 1
        %v836 = vrot.slane %v742, 1
        %v837 = vsel %vm294, %v835, %v836
        %v857 = vadd.f32 %v686, %v783
        %v858 = vadd.f32 %v687, %v786
        %v859 = vadd.f32 %v688, %v789
        %v860 = vadd.f32 %v689, %v792
        %v861 = vadd.f32 %v690, %v795
        %v862 = vadd.f32 %v691, %v798
        %v863 = vadd.f32 %v692, %v801
        %v864 = vadd.f32 %v693, %v804
        %v865 = vadd.f32 %v694, %v807
        %v866 = vadd.f32 %v695, %v810
        %v867 = vadd.f32 %v696, %v813
        %v868 = vadd.f32 %v697, %v816
        %v869 = vadd.f32 %v698, %v819
        %v870 = vadd.f32 %v699, %v822
        %v871 = vadd.f32 %v700, %v825
        %v872 = vadd.f32 %v701, %v828
        %v873 = vadd.f32 %v702, %v831
        %v874 = vadd.f32 %v703, %v834
        %v875 = vadd.f32 %v704, %v837
        %v876 = vpack.c.bf16 %v858, %v857
        %v877 = vpack.c.bf16 %v860, %v859
        %v878 = vpack.c.bf16 %v862, %v861
        %v879 = vpack.c.bf16 %v864, %v863
        %v880 = vpack.c.bf16 %v866, %v865
        %v881 = vpack.c.bf16 %v868, %v867
        %v882 = vpack.c.bf16 %v870, %v869
        %v883 = vpack.c.bf16 %v872, %v871
        %v884 = vpack.c.bf16 %v874, %v873
        %v885 = vpack.c.bf16 %v875, %v875
        %v887 = vsel %vm406, %v876, 0
        %v890 = vsel %vm406, %v877, 0
        %v893 = vsel %vm406, %v878, 0
        %v896 = vsel %vm406, %v879, 0
        %v899 = vsel %vm406, %v880, 0
        %v902 = vsel %vm406, %v881, 0
        %v905 = vsel %vm406, %v882, 0
        %v908 = vsel %vm406, %v883, 0
        %v911 = vsel %vm406, %v884, 0
        %v914 = vsel %vm406, %v885, 0
        %916 = vmatpush.bf16.msra.mxu0 0
        %917 = vmatpush.bf16.msra.mxu0 0
        %918 = vmatpush.bf16.msra.mxu0 0
        %919 = vmatpush.bf16.msra.mxu0 0
        %920 = vmatpush.bf16.msra.mxu0 0
        %921 = vmatpush.bf16.msra.mxu0 0
        %922 = vmatpush.bf16.msra.mxu0 0
        %923 = vmatpush.bf16.msra.mxu0 %v404
        %924 = vmatmul.bf16.gmra.mxu0 %v887
        %v925 = vpop.f32.mrf.mxu0
        %v926 = vadd.f32 0.0, %v925
        %v927 = vpop.f32.mrf.mxu0
        %v928 = vadd.f32 0.0, %v927
        %929 = vmatmul.bf16.gmra.mxu0 %v890
        %v930 = vpop.f32.mrf.mxu0
        %v931 = vadd.f32 0.0, %v930
        %v932 = vpop.f32.mrf.mxu0
        %v933 = vadd.f32 0.0, %v932
        %934 = vmatmul.bf16.gmra.mxu0 %v893
        %v935 = vpop.f32.mrf.mxu0
        %v936 = vadd.f32 0.0, %v935
        %v937 = vpop.f32.mrf.mxu0
        %v938 = vadd.f32 0.0, %v937
        %939 = vmatmul.bf16.gmra.mxu0 %v896
        %v940 = vpop.f32.mrf.mxu0
        %v941 = vadd.f32 0.0, %v940
        %v942 = vpop.f32.mrf.mxu0
        %v943 = vadd.f32 0.0, %v942
        %944 = vmatmul.bf16.gmra.mxu0 %v899
        %v945 = vpop.f32.mrf.mxu0
        %v946 = vadd.f32 0.0, %v945
        %v947 = vpop.f32.mrf.mxu0
        %v948 = vadd.f32 0.0, %v947
        %949 = vmatmul.bf16.gmra.mxu0 %v902
        %v950 = vpop.f32.mrf.mxu0
        %v951 = vadd.f32 0.0, %v950
        %v952 = vpop.f32.mrf.mxu0
        %v953 = vadd.f32 0.0, %v952
        %954 = vmatmul.bf16.gmra.mxu0 %v905
        %v955 = vpop.f32.mrf.mxu0
        %v956 = vadd.f32 0.0, %v955
        %v957 = vpop.f32.mrf.mxu0
        %v958 = vadd.f32 0.0, %v957
        %959 = vmatmul.bf16.gmra.mxu0 %v908
        %v960 = vpop.f32.mrf.mxu0
        %v961 = vadd.f32 0.0, %v960
        %v962 = vpop.f32.mrf.mxu0
        %v963 = vadd.f32 0.0, %v962
        %964 = vmatmul.bf16.gmra.mxu0 %v911
        %v965 = vpop.f32.mrf.mxu0
        %v966 = vadd.f32 0.0, %v965
        %v967 = vpop.f32.mrf.mxu0
        %v968 = vadd.f32 0.0, %v967
        %969 = vmatmul.bf16.gmra.mxu0 %v914
        %v970 = vpop.f32.mrf.mxu0
        %v971 = vadd.f32 0.0, %v970
        %v972 = vpop.f32.mrf.mxu0
        %973 = vdwg.mxu0
        %v974 = vsel %vm495, %v926, -inf
        %v975 = vsel %vm495, %v928, -inf
        %v976 = vsel %vm495, %v931, -inf
        %v977 = vsel %vm495, %v933, -inf
        %v978 = vsel %vm495, %v936, -inf
        %v979 = vmax.f32 %v974, %v978
        %v980 = vsel %vm495, %v938, -inf
        %v981 = vmax.f32 %v975, %v980
        %v982 = vsel %vm495, %v941, -inf
        %v983 = vmax.f32 %v976, %v982
        %v984 = vsel %vm495, %v943, -inf
        %v985 = vmax.f32 %v977, %v984
        %v986 = vsel %vm495, %v946, -inf
        %v987 = vmax.f32 %v979, %v986
        %v988 = vsel %vm495, %v948, -inf
        %v989 = vmax.f32 %v981, %v988
        %v990 = vsel %vm495, %v951, -inf
        %v991 = vmax.f32 %v983, %v990
        %v992 = vsel %vm495, %v953, -inf
        %v993 = vmax.f32 %v985, %v992
        %v994 = vsel %vm495, %v956, -inf
        %v995 = vmax.f32 %v987, %v994
        %v996 = vsel %vm495, %v958, -inf
        %v997 = vmax.f32 %v989, %v996
        %v998 = vsel %vm495, %v961, -inf
        %v999 = vmax.f32 %v991, %v998
        %v1000 = vsel %vm495, %v963, -inf
        %v1001 = vmax.f32 %v993, %v1000
        %v1002 = vsel %vm495, %v966, -inf
        %v1003 = vmax.f32 %v995, %v1002
        %v1004 = vsel %vm495, %v968, -inf
        %v1005 = vmax.f32 %v997, %v1004
        %v1006 = vsel %vm495, %v971, -inf
        %v1007 = vmax.f32 %v999, %v1006
        %v1008 = vmax.f32 %v1003, %v1005
        %v1009 = vmax.f32 %v1007, %v1001
        %v1010 = vmax.f32 %v1008, %v1009
        %v1011 = vsub.f32 %v926, %v1010
        %v1012 = vsub.f32 %v928, %v1010
        %v1013 = vsub.f32 %v931, %v1010
        %v1014 = vsub.f32 %v933, %v1010
        %v1015 = vsub.f32 %v936, %v1010
        %v1016 = vsub.f32 %v938, %v1010
        %v1017 = vsub.f32 %v941, %v1010
        %v1018 = vsub.f32 %v943, %v1010
        %v1019 = vsub.f32 %v946, %v1010
        %v1020 = vsub.f32 %v948, %v1010
        %v1021 = vsub.f32 %v951, %v1010
        %v1022 = vsub.f32 %v953, %v1010
        %v1023 = vsub.f32 %v956, %v1010
        %v1024 = vsub.f32 %v958, %v1010
        %v1025 = vsub.f32 %v961, %v1010
        %v1026 = vsub.f32 %v963, %v1010
        %v1027 = vsub.f32 %v966, %v1010
        %v1028 = vsub.f32 %v968, %v1010
        %v1029 = vsub.f32 %v971, %v1010
        %v1030 = vmul.f32 %v1011, 1.442695
        %v1031 = vpow.pop %v1030
        %v1032 = vmul.f32 %v1012, 1.442695
        %v1033 = vpow.pop %v1032
        %v1034 = vmul.f32 %v1013, 1.442695
        %v1035 = vpow.pop %v1034
        %v1036 = vmul.f32 %v1014, 1.442695
        %v1037 = vpow.pop %v1036
        %v1038 = vmul.f32 %v1015, 1.442695
        %v1039 = vpow.pop %v1038
        %v1040 = vmul.f32 %v1016, 1.442695
        %v1041 = vpow.pop %v1040
        %v1042 = vmul.f32 %v1017, 1.442695
        %v1043 = vpow.pop %v1042
        %v1044 = vmul.f32 %v1018, 1.442695
        %v1045 = vpow.pop %v1044
        %v1046 = vmul.f32 %v1019, 1.442695
        %v1047 = vpow.pop %v1046
        %v1048 = vmul.f32 %v1020, 1.442695
        %v1049 = vpow.pop %v1048
        %v1050 = vmul.f32 %v1021, 1.442695
        %v1051 = vpow.pop %v1050
        %v1052 = vmul.f32 %v1022, 1.442695
        %v1053 = vpow.pop %v1052
        %v1054 = vmul.f32 %v1023, 1.442695
        %v1055 = vpow.pop %v1054
        %v1056 = vmul.f32 %v1024, 1.442695
        %v1057 = vpow.pop %v1056
        %v1058 = vmul.f32 %v1025, 1.442695
        %v1059 = vpow.pop %v1058
        %v1060 = vmul.f32 %v1026, 1.442695
        %v1061 = vpow.pop %v1060
        %v1062 = vmul.f32 %v1027, 1.442695
        %v1063 = vpow.pop %v1062
        %v1064 = vmul.f32 %v1028, 1.442695
        %v1065 = vpow.pop %v1064
        %v1066 = vmul.f32 %v1029, 1.442695
        %v1067 = vpow.pop %v1066
        %v1068 = vsel %vm495, %v1031, 0.0
        %v1069 = vsel %vm495, %v1033, 0.0
        %v1070 = vadd.f32 %v1068, %v1069
        %v1071 = vsel %vm495, %v1035, 0.0
        %v1072 = vadd.f32 %v1070, %v1071
        %v1073 = vsel %vm495, %v1037, 0.0
        %v1074 = vadd.f32 %v1072, %v1073
        %v1075 = vsel %vm495, %v1039, 0.0
        %v1076 = vadd.f32 %v1074, %v1075
        %v1077 = vsel %vm495, %v1041, 0.0
        %v1078 = vadd.f32 %v1076, %v1077
        %v1079 = vsel %vm495, %v1043, 0.0
        %v1080 = vadd.f32 %v1078, %v1079
        %v1081 = vsel %vm495, %v1045, 0.0
        %v1082 = vadd.f32 %v1080, %v1081
        %v1083 = vsel %vm495, %v1047, 0.0
        %v1084 = vadd.f32 %v1082, %v1083
        %v1085 = vsel %vm495, %v1049, 0.0
        %v1086 = vadd.f32 %v1084, %v1085
        %v1087 = vsel %vm495, %v1051, 0.0
        %v1088 = vadd.f32 %v1086, %v1087
        %v1089 = vsel %vm495, %v1053, 0.0
        %v1090 = vadd.f32 %v1088, %v1089
        %v1091 = vsel %vm495, %v1055, 0.0
        %v1092 = vadd.f32 %v1090, %v1091
        %v1093 = vsel %vm495, %v1057, 0.0
        %v1094 = vadd.f32 %v1092, %v1093
        %v1095 = vsel %vm495, %v1059, 0.0
        %v1096 = vadd.f32 %v1094, %v1095
        %v1097 = vsel %vm495, %v1061, 0.0
        %v1098 = vadd.f32 %v1096, %v1097
        %v1099 = vsel %vm495, %v1063, 0.0
        %v1100 = vadd.f32 %v1098, %v1099
        %v1101 = vsel %vm495, %v1065, 0.0
        %v1102 = vadd.f32 %v1100, %v1101
        %v1103 = vsel %vm495, %v1067, 0.0
        %v1104 = vadd.f32 %v1102, %v1103
        %v1105 = vrcp.pop %v1104
        %v1106 = vmul.f32 %v1031, %v1105
        %v1107 = vmul.f32 %v1033, %v1105
        %v1108 = vmul.f32 %v1035, %v1105
        %v1109 = vmul.f32 %v1037, %v1105
        %v1110 = vmul.f32 %v1039, %v1105
        %v1111 = vmul.f32 %v1041, %v1105
        %v1112 = vmul.f32 %v1043, %v1105
        %v1113 = vmul.f32 %v1045, %v1105
        %v1114 = vmul.f32 %v1047, %v1105
        %v1115 = vmul.f32 %v1049, %v1105
        %v1116 = vmul.f32 %v1051, %v1105
        %v1117 = vmul.f32 %v1053, %v1105
        %v1118 = vmul.f32 %v1055, %v1105
        %v1119 = vmul.f32 %v1057, %v1105
        %v1120 = vmul.f32 %v1059, %v1105
        %v1121 = vmul.f32 %v1061, %v1105
        %v1122 = vmul.f32 %v1063, %v1105
        %v1123 = vmul.f32 %v1065, %v1105
        %v1124 = vmul.f32 %v1067, %v1105
        %v1125 = vpack.c.bf16 %v1106, %v1106
        %v1126 = vpack.c.bf16 %v1107, %v1107
        %v1127 = vpack.c.bf16 %v1108, %v1108
        %v1128 = vpack.c.bf16 %v1109, %v1109
        %v1129 = vpack.c.bf16 %v1110, %v1110
        %v1130 = vpack.c.bf16 %v1111, %v1111
        %v1131 = vpack.c.bf16 %v1112, %v1112
        %v1132 = vpack.c.bf16 %v1113, %v1113
        %v1133 = vpack.c.bf16 %v1114, %v1114
        %v1134 = vpack.c.bf16 %v1115, %v1115
        %v1135 = vpack.c.bf16 %v1116, %v1116
        %v1136 = vpack.c.bf16 %v1117, %v1117
        %v1137 = vpack.c.bf16 %v1118, %v1118
        %v1138 = vpack.c.bf16 %v1119, %v1119
        %v1139 = vpack.c.bf16 %v1120, %v1120
        %v1140 = vpack.c.bf16 %v1121, %v1121
        %v1141 = vpack.c.bf16 %v1122, %v1122
        %v1142 = vpack.c.bf16 %v1123, %v1123
        %v1143 = vpack.c.bf16 %v1124, %v1124
        %1163 = vrot.lane.b32.xlu0 %v1125, 64
        %v1164 = vpop.permute.xlu0 %1163
        %1165 = vrot.lane.b32.xlu0 %v1126, 64
        %v1166 = vpop.permute.xlu0 %1165
        %1167 = vrot.lane.b32.xlu0 %v1127, 64
        %v1168 = vpop.permute.xlu0 %1167
        %1169 = vrot.lane.b32.xlu0 %v1128, 64
        %v1170 = vpop.permute.xlu0 %1169
        %1171 = vrot.lane.b32.xlu0 %v1129, 64
        %v1172 = vpop.permute.xlu0 %1171
        %1173 = vrot.lane.b32.xlu0 %v1130, 64
        %v1174 = vpop.permute.xlu0 %1173
        %1175 = vrot.lane.b32.xlu0 %v1131, 64
        %v1176 = vpop.permute.xlu0 %1175
        %1177 = vrot.lane.b32.xlu0 %v1132, 64
        %v1178 = vpop.permute.xlu0 %1177
        %1179 = vrot.lane.b32.xlu0 %v1133, 64
        %v1180 = vpop.permute.xlu0 %1179
        %1181 = vrot.lane.b32.xlu0 %v1134, 64
        %v1182 = vpop.permute.xlu0 %1181
        %1183 = vrot.lane.b32.xlu0 %v1135, 64
        %v1184 = vpop.permute.xlu0 %1183
        %1185 = vrot.lane.b32.xlu0 %v1136, 64
        %v1186 = vpop.permute.xlu0 %1185
        %1187 = vrot.lane.b32.xlu0 %v1137, 64
        %v1188 = vpop.permute.xlu0 %1187
        %1189 = vrot.lane.b32.xlu0 %v1138, 64
        %v1190 = vpop.permute.xlu0 %1189
        %1191 = vrot.lane.b32.xlu0 %v1139, 64
        %v1192 = vpop.permute.xlu0 %1191
        %1193 = vrot.lane.b32.xlu0 %v1140, 64
        %v1194 = vpop.permute.xlu0 %1193
        %1195 = vrot.lane.b32.xlu0 %v1141, 64
        %v1196 = vpop.permute.xlu0 %1195
        %1197 = vrot.lane.b32.xlu0 %v1142, 64
        %v1198 = vpop.permute.xlu0 %1197
        %1199 = vrot.lane.b32.xlu0 %v1143, 64
        %v1200 = vpop.permute.xlu0 %1199
        %vm1220 = vcmask 1043968
        %1221 = vst.msk [vmem:[%s150] sm:$0xf] %vm1220, %v1164
        %1222 = vst.msk [vmem:[%s150 + $0x8] sm:$0xf] %vm1220, %v1166
        %1223 = vst.msk [vmem:[%s150 + $0x10] sm:$0xf] %vm1220, %v1168
        %1224 = vst.msk [vmem:[%s150 + $0x18] sm:$0xf] %vm1220, %v1170
        %1225 = vst.msk [vmem:[%s150 + $0x20] sm:$0xf] %vm1220, %v1172
        %1226 = vst.msk [vmem:[%s150 + $0x28] sm:$0xf] %vm1220, %v1174
        %1227 = vst.msk [vmem:[%s150 + $0x30] sm:$0xf] %vm1220, %v1176
        %1228 = vst.msk [vmem:[%s150 + $0x38] sm:$0xf] %vm1220, %v1178
        %1229 = vst.msk [vmem:[%s150 + $0x40] sm:$0xf] %vm1220, %v1180
        %1230 = vst.msk [vmem:[%s150 + $0x48] sm:$0xf] %vm1220, %v1182
        %1231 = vst.msk [vmem:[%s150 + $0x50] sm:$0xf] %vm1220, %v1184
        %1232 = vst.msk [vmem:[%s150 + $0x58] sm:$0xf] %vm1220, %v1186
        %1233 = vst.msk [vmem:[%s150 + $0x60] sm:$0xf] %vm1220, %v1188
        %1234 = vst.msk [vmem:[%s150 + $0x68] sm:$0xf] %vm1220, %v1190
        %1235 = vst.msk [vmem:[%s150 + $0x70] sm:$0xf] %vm1220, %v1192
        %1236 = vst.msk [vmem:[%s150 + $0x78] sm:$0xf] %vm1220, %v1194
        %1237 = vst.msk [vmem:[%s150 + $0x80] sm:$0xf] %vm1220, %v1196
        %1238 = vst.msk [vmem:[%s150 + $0x88] sm:$0xf] %vm1220, %v1198
        %1239 = vst.msk [vmem:[%s150 + $0x90] sm:$0xf] %vm1220, %v1200
        %v1240 = vmul.f32 %v160, 0.125
        %v1241 = vmul.f32 %v162, 0.125
        %v1242 = vmul.f32 %v164, 0.125
        %v1243 = vmul.f32 %v166, 0.125
        %v1244 = vmul.f32 %v168, 0.125
        %v1245 = vmul.f32 %v170, 0.125
        %v1246 = vmul.f32 %v172, 0.125
        %v1247 = vmul.f32 %v174, 0.125
        %v1248 = vmul.f32 %v176, 0.125
        %v1249 = vmul.f32 %v178, 0.125
        %v1250 = vmul.f32 %v180, 0.125
        %v1251 = vmul.f32 %v182, 0.125
        %v1252 = vmul.f32 %v184, 0.125
        %v1253 = vmul.f32 %v186, 0.125
        %v1254 = vmul.f32 %v188, 0.125
        %v1255 = vmul.f32 %v190, 0.125
        %v1256 = vmul.f32 %v192, 0.125
        %v1257 = vmul.f32 %v194, 0.125
        %v1258 = vmul.f32 %v196, 0.125
        %v1297 = vrot.slane %v686, 1
        %v1298 = vrot.slane %v1240, 1
        %v1299 = vsel %vm294, %v1297, %v1298
        %v1300 = vrot.slane %v687, 1
        %v1301 = vrot.slane %v1241, 1
        %v1302 = vsel %vm294, %v1300, %v1301
        %v1303 = vrot.slane %v688, 1
        %v1304 = vrot.slane %v1242, 1
        %v1305 = vsel %vm294, %v1303, %v1304
        %v1306 = vrot.slane %v689, 1
        %v1307 = vrot.slane %v1243, 1
        %v1308 = vsel %vm294, %v1306, %v1307
        %v1309 = vrot.slane %v690, 1
        %v1310 = vrot.slane %v1244, 1
        %v1311 = vsel %vm294, %v1309, %v1310
        %v1312 = vrot.slane %v691, 1
        %v1313 = vrot.slane %v1245, 1
        %v1314 = vsel %vm294, %v1312, %v1313
        %v1315 = vrot.slane %v692, 1
        %v1316 = vrot.slane %v1246, 1
        %v1317 = vsel %vm294, %v1315, %v1316
        %v1318 = vrot.slane %v693, 1
        %v1319 = vrot.slane %v1247, 1
        %v1320 = vsel %vm294, %v1318, %v1319
        %v1321 = vrot.slane %v694, 1
        %v1322 = vrot.slane %v1248, 1
        %v1323 = vsel %vm294, %v1321, %v1322
        %v1324 = vrot.slane %v695, 1
        %v1325 = vrot.slane %v1249, 1
        %v1326 = vsel %vm294, %v1324, %v1325
        %v1327 = vrot.slane %v696, 1
        %v1328 = vrot.slane %v1250, 1
        %v1329 = vsel %vm294, %v1327, %v1328
        %v1330 = vrot.slane %v697, 1
        %v1331 = vrot.slane %v1251, 1
        %v1332 = vsel %vm294, %v1330, %v1331
        %v1333 = vrot.slane %v698, 1
        %v1334 = vrot.slane %v1252, 1
        %v1335 = vsel %vm294, %v1333, %v1334
        %v1336 = vrot.slane %v699, 1
        %v1337 = vrot.slane %v1253, 1
        %v1338 = vsel %vm294, %v1336, %v1337
        %v1339 = vrot.slane %v700, 1
        %v1340 = vrot.slane %v1254, 1
        %v1341 = vsel %vm294, %v1339, %v1340
        %v1342 = vrot.slane %v701, 1
        %v1343 = vrot.slane %v1255, 1
        %v1344 = vsel %vm294, %v1342, %v1343
        %v1345 = vrot.slane %v702, 1
        %v1346 = vrot.slane %v1256, 1
        %v1347 = vsel %vm294, %v1345, %v1346
        %v1348 = vrot.slane %v703, 1
        %v1349 = vrot.slane %v1257, 1
        %v1350 = vsel %vm294, %v1348, %v1349
        %v1351 = vrot.slane %v704, 1
        %v1352 = vrot.slane %v1258, 1
        %v1353 = vsel %vm294, %v1351, %v1352
        %v1392 = vadd.f32 %v705, %v1299
        %v1393 = vadd.f32 %v706, %v1298
        %v1394 = vadd.f32 %v707, %v1302
        %v1395 = vadd.f32 %v708, %v1301
        %v1396 = vadd.f32 %v709, %v1305
        %v1397 = vadd.f32 %v710, %v1304
        %v1398 = vadd.f32 %v711, %v1308
        %v1399 = vadd.f32 %v712, %v1307
        %v1400 = vadd.f32 %v713, %v1311
        %v1401 = vadd.f32 %v714, %v1310
        %v1402 = vadd.f32 %v715, %v1314
        %v1403 = vadd.f32 %v716, %v1313
        %v1404 = vadd.f32 %v717, %v1317
        %v1405 = vadd.f32 %v718, %v1316
        %v1406 = vadd.f32 %v719, %v1320
        %v1407 = vadd.f32 %v720, %v1319
        %v1408 = vadd.f32 %v721, %v1323
        %v1409 = vadd.f32 %v722, %v1322
        %v1410 = vadd.f32 %v723, %v1326
        %v1411 = vadd.f32 %v724, %v1325
        %v1412 = vadd.f32 %v725, %v1329
        %v1413 = vadd.f32 %v726, %v1328
        %v1414 = vadd.f32 %v727, %v1332
        %v1415 = vadd.f32 %v728, %v1331
        %v1416 = vadd.f32 %v729, %v1335
        %v1417 = vadd.f32 %v730, %v1334
        %v1418 = vadd.f32 %v731, %v1338
        %v1419 = vadd.f32 %v732, %v1337
        %v1420 = vadd.f32 %v733, %v1341
        %v1421 = vadd.f32 %v734, %v1340
        %v1422 = vadd.f32 %v735, %v1344
        %v1423 = vadd.f32 %v736, %v1343
        %v1424 = vadd.f32 %v737, %v1347
        %v1425 = vadd.f32 %v738, %v1346
        %v1426 = vadd.f32 %v739, %v1350
        %v1427 = vadd.f32 %v740, %v1349
        %v1428 = vadd.f32 %v741, %v1353
        %v1429 = vadd.f32 %v742, %v1352
        %v1468 = vrot.slane %v1392, 1
        %v1469 = vrot.slane %v1393, 1
        %v1470 = vsel %vm294, %v1468, %v1469
        %v1471 = vrot.slane %v1394, 1
        %v1472 = vrot.slane %v1395, 1
        %v1473 = vsel %vm294, %v1471, %v1472
        %v1474 = vrot.slane %v1396, 1
        %v1475 = vrot.slane %v1397, 1
        %v1476 = vsel %vm294, %v1474, %v1475
        %v1477 = vrot.slane %v1398, 1
        %v1478 = vrot.slane %v1399, 1
        %v1479 = vsel %vm294, %v1477, %v1478
        %v1480 = vrot.slane %v1400, 1
        %v1481 = vrot.slane %v1401, 1
        %v1482 = vsel %vm294, %v1480, %v1481
        %v1483 = vrot.slane %v1402, 1
        %v1484 = vrot.slane %v1403, 1
        %v1485 = vsel %vm294, %v1483, %v1484
        %v1486 = vrot.slane %v1404, 1
        %v1487 = vrot.slane %v1405, 1
        %v1488 = vsel %vm294, %v1486, %v1487
        %v1489 = vrot.slane %v1406, 1
        %v1490 = vrot.slane %v1407, 1
        %v1491 = vsel %vm294, %v1489, %v1490
        %v1492 = vrot.slane %v1408, 1
        %v1493 = vrot.slane %v1409, 1
        %v1494 = vsel %vm294, %v1492, %v1493
        %v1495 = vrot.slane %v1410, 1
        %v1496 = vrot.slane %v1411, 1
        %v1497 = vsel %vm294, %v1495, %v1496
        %v1498 = vrot.slane %v1412, 1
        %v1499 = vrot.slane %v1413, 1
        %v1500 = vsel %vm294, %v1498, %v1499
        %v1501 = vrot.slane %v1414, 1
        %v1502 = vrot.slane %v1415, 1
        %v1503 = vsel %vm294, %v1501, %v1502
        %v1504 = vrot.slane %v1416, 1
        %v1505 = vrot.slane %v1417, 1
        %v1506 = vsel %vm294, %v1504, %v1505
        %v1507 = vrot.slane %v1418, 1
        %v1508 = vrot.slane %v1419, 1
        %v1509 = vsel %vm294, %v1507, %v1508
        %v1510 = vrot.slane %v1420, 1
        %v1511 = vrot.slane %v1421, 1
        %v1512 = vsel %vm294, %v1510, %v1511
        %v1513 = vrot.slane %v1422, 1
        %v1514 = vrot.slane %v1423, 1
        %v1515 = vsel %vm294, %v1513, %v1514
        %v1516 = vrot.slane %v1424, 1
        %v1517 = vrot.slane %v1425, 1
        %v1518 = vsel %vm294, %v1516, %v1517
        %v1519 = vrot.slane %v1426, 1
        %v1520 = vrot.slane %v1427, 1
        %v1521 = vsel %vm294, %v1519, %v1520
        %v1522 = vrot.slane %v1428, 1
        %v1523 = vrot.slane %v1429, 1
        %v1524 = vsel %vm294, %v1522, %v1523
        %v1544 = vpack.c.bf16 %v1473, %v1470
        %v1545 = vpack.c.bf16 %v1479, %v1476
        %v1546 = vpack.c.bf16 %v1485, %v1482
        %v1547 = vpack.c.bf16 %v1491, %v1488
        %v1548 = vpack.c.bf16 %v1497, %v1494
        %v1549 = vpack.c.bf16 %v1503, %v1500
        %v1550 = vpack.c.bf16 %v1509, %v1506
        %v1551 = vpack.c.bf16 %v1515, %v1512
        %v1552 = vpack.c.bf16 %v1521, %v1518
        %v1553 = vpack.c.bf16 %v1524, %v1524
        %v1555 = vsel %vm406, %v1544, 0
        %v1558 = vsel %vm406, %v1545, 0
        %v1561 = vsel %vm406, %v1546, 0
        %v1564 = vsel %vm406, %v1547, 0
        %v1567 = vsel %vm406, %v1548, 0
        %v1570 = vsel %vm406, %v1549, 0
        %v1573 = vsel %vm406, %v1550, 0
        %v1576 = vsel %vm406, %v1551, 0
        %v1579 = vsel %vm406, %v1552, 0
        %v1582 = vsel %vm406, %v1553, 0
        %1584 = vmatpush.bf16.msra.mxu0 0
        %1585 = vmatpush.bf16.msra.mxu0 0
        %1586 = vmatpush.bf16.msra.mxu0 0
        %1587 = vmatpush.bf16.msra.mxu0 0
        %1588 = vmatpush.bf16.msra.mxu0 0
        %1589 = vmatpush.bf16.msra.mxu0 0
        %1590 = vmatpush.bf16.msra.mxu0 0
        %1591 = vmatpush.bf16.msra.mxu0 %v404
        %1592 = vmatmul.bf16.gmra.mxu0 %v1555
        %v1593 = vpop.f32.mrf.mxu0
        %v1594 = vadd.f32 0.0, %v1593
        %v1595 = vpop.f32.mrf.mxu0
        %v1596 = vadd.f32 0.0, %v1595
        %1597 = vmatmul.bf16.gmra.mxu0 %v1558
        %v1598 = vpop.f32.mrf.mxu0
        %v1599 = vadd.f32 0.0, %v1598
        %v1600 = vpop.f32.mrf.mxu0
        %v1601 = vadd.f32 0.0, %v1600
        %1602 = vmatmul.bf16.gmra.mxu0 %v1561
        %v1603 = vpop.f32.mrf.mxu0
        %v1604 = vadd.f32 0.0, %v1603
        %v1605 = vpop.f32.mrf.mxu0
        %v1606 = vadd.f32 0.0, %v1605
        %1607 = vmatmul.bf16.gmra.mxu0 %v1564
        %v1608 = vpop.f32.mrf.mxu0
        %v1609 = vadd.f32 0.0, %v1608
        %v1610 = vpop.f32.mrf.mxu0
        %v1611 = vadd.f32 0.0, %v1610
        %1612 = vmatmul.bf16.gmra.mxu0 %v1567
        %v1613 = vpop.f32.mrf.mxu0
        %v1614 = vadd.f32 0.0, %v1613
        %v1615 = vpop.f32.mrf.mxu0
        %v1616 = vadd.f32 0.0, %v1615
        %1617 = vmatmul.bf16.gmra.mxu0 %v1570
        %v1618 = vpop.f32.mrf.mxu0
        %v1619 = vadd.f32 0.0, %v1618
        %v1620 = vpop.f32.mrf.mxu0
        %v1621 = vadd.f32 0.0, %v1620
        %1622 = vmatmul.bf16.gmra.mxu0 %v1573
        %v1623 = vpop.f32.mrf.mxu0
        %v1624 = vadd.f32 0.0, %v1623
        %v1625 = vpop.f32.mrf.mxu0
        %v1626 = vadd.f32 0.0, %v1625
        %1627 = vmatmul.bf16.gmra.mxu0 %v1576
        %v1628 = vpop.f32.mrf.mxu0
        %v1629 = vadd.f32 0.0, %v1628
        %v1630 = vpop.f32.mrf.mxu0
        %v1631 = vadd.f32 0.0, %v1630
        %1632 = vmatmul.bf16.gmra.mxu0 %v1579
        %v1633 = vpop.f32.mrf.mxu0
        %v1634 = vadd.f32 0.0, %v1633
        %v1635 = vpop.f32.mrf.mxu0
        %v1636 = vadd.f32 0.0, %v1635
        %1637 = vmatmul.bf16.gmra.mxu0 %v1582
        %v1638 = vpop.f32.mrf.mxu0
        %v1639 = vadd.f32 0.0, %v1638
        %v1640 = vpop.f32.mrf.mxu0
        %1641 = vdwg.mxu0
        %v1642 = vsel %vm495, %v1594, -inf
        %v1643 = vsel %vm495, %v1596, -inf
        %v1644 = vsel %vm495, %v1599, -inf
        %v1645 = vsel %vm495, %v1601, -inf
        %v1646 = vsel %vm495, %v1604, -inf
        %v1647 = vmax.f32 %v1642, %v1646
        %v1648 = vsel %vm495, %v1606, -inf
        %v1649 = vmax.f32 %v1643, %v1648
        %v1650 = vsel %vm495, %v1609, -inf
        %v1651 = vmax.f32 %v1644, %v1650
        %v1652 = vsel %vm495, %v1611, -inf
        %v1653 = vmax.f32 %v1645, %v1652
        %v1654 = vsel %vm495, %v1614, -inf
        %v1655 = vmax.f32 %v1647, %v1654
        %v1656 = vsel %vm495, %v1616, -inf
        %v1657 = vmax.f32 %v1649, %v1656
        %v1658 = vsel %vm495, %v1619, -inf
        %v1659 = vmax.f32 %v1651, %v1658
        %v1660 = vsel %vm495, %v1621, -inf
        %v1661 = vmax.f32 %v1653, %v1660
        %v1662 = vsel %vm495, %v1624, -inf
        %v1663 = vmax.f32 %v1655, %v1662
        %v1664 = vsel %vm495, %v1626, -inf
        %v1665 = vmax.f32 %v1657, %v1664
        %v1666 = vsel %vm495, %v1629, -inf
        %v1667 = vmax.f32 %v1659, %v1666
        %v1668 = vsel %vm495, %v1631, -inf
        %v1669 = vmax.f32 %v1661, %v1668
        %v1670 = vsel %vm495, %v1634, -inf
        %v1671 = vmax.f32 %v1663, %v1670
        %v1672 = vsel %vm495, %v1636, -inf
        %v1673 = vmax.f32 %v1665, %v1672
        %v1674 = vsel %vm495, %v1639, -inf
        %v1675 = vmax.f32 %v1667, %v1674
        %v1676 = vmax.f32 %v1671, %v1673
        %v1677 = vmax.f32 %v1675, %v1669
        %v1678 = vmax.f32 %v1676, %v1677
        %v1679 = vsub.f32 %v1594, %v1678
        %v1680 = vsub.f32 %v1596, %v1678
        %v1681 = vsub.f32 %v1599, %v1678
        %v1682 = vsub.f32 %v1601, %v1678
        %v1683 = vsub.f32 %v1604, %v1678
        %v1684 = vsub.f32 %v1606, %v1678
        %v1685 = vsub.f32 %v1609, %v1678
        %v1686 = vsub.f32 %v1611, %v1678
        %v1687 = vsub.f32 %v1614, %v1678
        %v1688 = vsub.f32 %v1616, %v1678
        %v1689 = vsub.f32 %v1619, %v1678
        %v1690 = vsub.f32 %v1621, %v1678
        %v1691 = vsub.f32 %v1624, %v1678
        %v1692 = vsub.f32 %v1626, %v1678
        %v1693 = vsub.f32 %v1629, %v1678
        %v1694 = vsub.f32 %v1631, %v1678
        %v1695 = vsub.f32 %v1634, %v1678
        %v1696 = vsub.f32 %v1636, %v1678
        %v1697 = vsub.f32 %v1639, %v1678
        %v1698 = vmul.f32 %v1679, 1.442695
        %v1699 = vpow.pop %v1698
        %v1700 = vmul.f32 %v1680, 1.442695
        %v1701 = vpow.pop %v1700
        %v1702 = vmul.f32 %v1681, 1.442695
        %v1703 = vpow.pop %v1702
        %v1704 = vmul.f32 %v1682, 1.442695
        %v1705 = vpow.pop %v1704
        %v1706 = vmul.f32 %v1683, 1.442695
        %v1707 = vpow.pop %v1706
        %v1708 = vmul.f32 %v1684, 1.442695
        %v1709 = vpow.pop %v1708
        %v1710 = vmul.f32 %v1685, 1.442695
        %v1711 = vpow.pop %v1710
        %v1712 = vmul.f32 %v1686, 1.442695
        %v1713 = vpow.pop %v1712
        %v1714 = vmul.f32 %v1687, 1.442695
        %v1715 = vpow.pop %v1714
        %v1716 = vmul.f32 %v1688, 1.442695
        %v1717 = vpow.pop %v1716
        %v1718 = vmul.f32 %v1689, 1.442695
        %v1719 = vpow.pop %v1718
        %v1720 = vmul.f32 %v1690, 1.442695
        %v1721 = vpow.pop %v1720
        %v1722 = vmul.f32 %v1691, 1.442695
        %v1723 = vpow.pop %v1722
        %v1724 = vmul.f32 %v1692, 1.442695
        %v1725 = vpow.pop %v1724
        %v1726 = vmul.f32 %v1693, 1.442695
        %v1727 = vpow.pop %v1726
        %v1728 = vmul.f32 %v1694, 1.442695
        %v1729 = vpow.pop %v1728
        %v1730 = vmul.f32 %v1695, 1.442695
        %v1731 = vpow.pop %v1730
        %v1732 = vmul.f32 %v1696, 1.442695
        %v1733 = vpow.pop %v1732
        %v1734 = vmul.f32 %v1697, 1.442695
        %v1735 = vpow.pop %v1734
        %v1736 = vsel %vm495, %v1699, 0.0
        %v1737 = vsel %vm495, %v1701, 0.0
        %v1738 = vadd.f32 %v1736, %v1737
        %v1739 = vsel %vm495, %v1703, 0.0
        %v1740 = vadd.f32 %v1738, %v1739
        %v1741 = vsel %vm495, %v1705, 0.0
        %v1742 = vadd.f32 %v1740, %v1741
        %v1743 = vsel %vm495, %v1707, 0.0
        %v1744 = vadd.f32 %v1742, %v1743
        %v1745 = vsel %vm495, %v1709, 0.0
        %v1746 = vadd.f32 %v1744, %v1745
        %v1747 = vsel %vm495, %v1711, 0.0
        %v1748 = vadd.f32 %v1746, %v1747
        %v1749 = vsel %vm495, %v1713, 0.0
        %v1750 = vadd.f32 %v1748, %v1749
        %v1751 = vsel %vm495, %v1715, 0.0
        %v1752 = vadd.f32 %v1750, %v1751
        %v1753 = vsel %vm495, %v1717, 0.0
        %v1754 = vadd.f32 %v1752, %v1753
        %v1755 = vsel %vm495, %v1719, 0.0
        %v1756 = vadd.f32 %v1754, %v1755
        %v1757 = vsel %vm495, %v1721, 0.0
        %v1758 = vadd.f32 %v1756, %v1757
        %v1759 = vsel %vm495, %v1723, 0.0
        %v1760 = vadd.f32 %v1758, %v1759
        %v1761 = vsel %vm495, %v1725, 0.0
        %v1762 = vadd.f32 %v1760, %v1761
        %v1763 = vsel %vm495, %v1727, 0.0
        %v1764 = vadd.f32 %v1762, %v1763
        %v1765 = vsel %vm495, %v1729, 0.0
        %v1766 = vadd.f32 %v1764, %v1765
        %v1767 = vsel %vm495, %v1731, 0.0
        %v1768 = vadd.f32 %v1766, %v1767
        %v1769 = vsel %vm495, %v1733, 0.0
        %v1770 = vadd.f32 %v1768, %v1769
        %v1771 = vsel %vm495, %v1735, 0.0
        %v1772 = vadd.f32 %v1770, %v1771
        %v1773 = vrcp.pop %v1772
        %v1774 = vmul.f32 %v1699, %v1773
        %v1775 = vmul.f32 %v1701, %v1773
        %v1776 = vmul.f32 %v1703, %v1773
        %v1777 = vmul.f32 %v1705, %v1773
        %v1778 = vmul.f32 %v1707, %v1773
        %v1779 = vmul.f32 %v1709, %v1773
        %v1780 = vmul.f32 %v1711, %v1773
        %v1781 = vmul.f32 %v1713, %v1773
        %v1782 = vmul.f32 %v1715, %v1773
        %v1783 = vmul.f32 %v1717, %v1773
        %v1784 = vmul.f32 %v1719, %v1773
        %v1785 = vmul.f32 %v1721, %v1773
        %v1786 = vmul.f32 %v1723, %v1773
        %v1787 = vmul.f32 %v1725, %v1773
        %v1788 = vmul.f32 %v1727, %v1773
        %v1789 = vmul.f32 %v1729, %v1773
        %v1790 = vmul.f32 %v1731, %v1773
        %v1791 = vmul.f32 %v1733, %v1773
        %v1792 = vmul.f32 %v1735, %v1773
        %v1793 = vpack.c.bf16 %v1774, %v1774
        %v1794 = vpack.c.bf16 %v1775, %v1775
        %v1795 = vpack.c.bf16 %v1776, %v1776
        %v1796 = vpack.c.bf16 %v1777, %v1777
        %v1797 = vpack.c.bf16 %v1778, %v1778
        %v1798 = vpack.c.bf16 %v1779, %v1779
        %v1799 = vpack.c.bf16 %v1780, %v1780
        %v1800 = vpack.c.bf16 %v1781, %v1781
        %v1801 = vpack.c.bf16 %v1782, %v1782
        %v1802 = vpack.c.bf16 %v1783, %v1783
        %v1803 = vpack.c.bf16 %v1784, %v1784
        %v1804 = vpack.c.bf16 %v1785, %v1785
        %v1805 = vpack.c.bf16 %v1786, %v1786
        %v1806 = vpack.c.bf16 %v1787, %v1787
        %v1807 = vpack.c.bf16 %v1788, %v1788
        %v1808 = vpack.c.bf16 %v1789, %v1789
        %v1809 = vpack.c.bf16 %v1790, %v1790
        %v1810 = vpack.c.bf16 %v1791, %v1791
        %v1811 = vpack.c.bf16 %v1792, %v1792
        %1812 = vst.msk [vmem:[%s150 + $0x4] sm:$0xf] %vm666, %v1793
        %1813 = vst.msk [vmem:[%s150 + $0xc] sm:$0xf] %vm666, %v1794
        %1814 = vst.msk [vmem:[%s150 + $0x14] sm:$0xf] %vm666, %v1795
        %1815 = vst.msk [vmem:[%s150 + $0x1c] sm:$0xf] %vm666, %v1796
        %1816 = vst.msk [vmem:[%s150 + $0x24] sm:$0xf] %vm666, %v1797
        %1817 = vst.msk [vmem:[%s150 + $0x2c] sm:$0xf] %vm666, %v1798
        %1818 = vst.msk [vmem:[%s150 + $0x34] sm:$0xf] %vm666, %v1799
        %1819 = vst.msk [vmem:[%s150 + $0x3c] sm:$0xf] %vm666, %v1800
        %1820 = vst.msk [vmem:[%s150 + $0x44] sm:$0xf] %vm666, %v1801
        %1821 = vst.msk [vmem:[%s150 + $0x4c] sm:$0xf] %vm666, %v1802
        %1822 = vst.msk [vmem:[%s150 + $0x54] sm:$0xf] %vm666, %v1803
        %1823 = vst.msk [vmem:[%s150 + $0x5c] sm:$0xf] %vm666, %v1804
        %1824 = vst.msk [vmem:[%s150 + $0x64] sm:$0xf] %vm666, %v1805
        %1825 = vst.msk [vmem:[%s150 + $0x6c] sm:$0xf] %vm666, %v1806
        %1826 = vst.msk [vmem:[%s150 + $0x74] sm:$0xf] %vm666, %v1807
        %1827 = vst.msk [vmem:[%s150 + $0x7c] sm:$0xf] %vm666, %v1808
        %1828 = vst.msk [vmem:[%s150 + $0x84] sm:$0xf] %vm666, %v1809
        %1829 = vst.msk [vmem:[%s150 + $0x8c] sm:$0xf] %vm666, %v1810
        %1830 = vst.msk [vmem:[%s150 + $0x94] sm:$0xf] %vm666, %v1811
        %v1831 = vmul.f32 %v160, 0.375
        %v1832 = vmul.f32 %v162, 0.375
        %v1833 = vmul.f32 %v164, 0.375
        %v1834 = vmul.f32 %v166, 0.375
        %v1835 = vmul.f32 %v168, 0.375
        %v1836 = vmul.f32 %v170, 0.375
        %v1837 = vmul.f32 %v172, 0.375
        %v1838 = vmul.f32 %v174, 0.375
        %v1839 = vmul.f32 %v176, 0.375
        %v1840 = vmul.f32 %v178, 0.375
        %v1841 = vmul.f32 %v180, 0.375
        %v1842 = vmul.f32 %v182, 0.375
        %v1843 = vmul.f32 %v184, 0.375
        %v1844 = vmul.f32 %v186, 0.375
        %v1845 = vmul.f32 %v188, 0.375
        %v1846 = vmul.f32 %v190, 0.375
        %v1847 = vmul.f32 %v192, 0.375
        %v1848 = vmul.f32 %v194, 0.375
        %v1849 = vmul.f32 %v196, 0.375
        %v1888 = vrot.slane %v199, 1
        %v1889 = vrot.slane %v1831, 1
        %v1890 = vsel %vm294, %v1888, %v1889
        %v1891 = vrot.slane %v200, 1
        %v1892 = vrot.slane %v1832, 1
        %v1893 = vsel %vm294, %v1891, %v1892
        %v1894 = vrot.slane %v201, 1
        %v1895 = vrot.slane %v1833, 1
        %v1896 = vsel %vm294, %v1894, %v1895
        %v1897 = vrot.slane %v202, 1
        %v1898 = vrot.slane %v1834, 1
        %v1899 = vsel %vm294, %v1897, %v1898
        %v1900 = vrot.slane %v203, 1
        %v1901 = vrot.slane %v1835, 1
        %v1902 = vsel %vm294, %v1900, %v1901
        %v1903 = vrot.slane %v204, 1
        %v1904 = vrot.slane %v1836, 1
        %v1905 = vsel %vm294, %v1903, %v1904
        %v1906 = vrot.slane %v205, 1
        %v1907 = vrot.slane %v1837, 1
        %v1908 = vsel %vm294, %v1906, %v1907
        %v1909 = vrot.slane %v206, 1
        %v1910 = vrot.slane %v1838, 1
        %v1911 = vsel %vm294, %v1909, %v1910
        %v1912 = vrot.slane %v207, 1
        %v1913 = vrot.slane %v1839, 1
        %v1914 = vsel %vm294, %v1912, %v1913
        %v1915 = vrot.slane %v208, 1
        %v1916 = vrot.slane %v1840, 1
        %v1917 = vsel %vm294, %v1915, %v1916
        %v1918 = vrot.slane %v209, 1
        %v1919 = vrot.slane %v1841, 1
        %v1920 = vsel %vm294, %v1918, %v1919
        %v1921 = vrot.slane %v210, 1
        %v1922 = vrot.slane %v1842, 1
        %v1923 = vsel %vm294, %v1921, %v1922
        %v1924 = vrot.slane %v211, 1
        %v1925 = vrot.slane %v1843, 1
        %v1926 = vsel %vm294, %v1924, %v1925
        %v1927 = vrot.slane %v212, 1
        %v1928 = vrot.slane %v1844, 1
        %v1929 = vsel %vm294, %v1927, %v1928
        %v1930 = vrot.slane %v213, 1
        %v1931 = vrot.slane %v1845, 1
        %v1932 = vsel %vm294, %v1930, %v1931
        %v1933 = vrot.slane %v214, 1
        %v1934 = vrot.slane %v1846, 1
        %v1935 = vsel %vm294, %v1933, %v1934
        %v1936 = vrot.slane %v215, 1
        %v1937 = vrot.slane %v1847, 1
        %v1938 = vsel %vm294, %v1936, %v1937
        %v1939 = vrot.slane %v216, 1
        %v1940 = vrot.slane %v1848, 1
        %v1941 = vsel %vm294, %v1939, %v1940
        %v1942 = vrot.slane %v217, 1
        %v1943 = vrot.slane %v1849, 1
        %v1944 = vsel %vm294, %v1942, %v1943
        %v1983 = vadd.f32 %v218, %v1890
        %v1984 = vadd.f32 %v219, %v1889
        %v1985 = vadd.f32 %v220, %v1893
        %v1986 = vadd.f32 %v221, %v1892
        %v1987 = vadd.f32 %v222, %v1896
        %v1988 = vadd.f32 %v223, %v1895
        %v1989 = vadd.f32 %v224, %v1899
        %v1990 = vadd.f32 %v225, %v1898
        %v1991 = vadd.f32 %v226, %v1902
        %v1992 = vadd.f32 %v227, %v1901
        %v1993 = vadd.f32 %v228, %v1905
        %v1994 = vadd.f32 %v229, %v1904
        %v1995 = vadd.f32 %v230, %v1908
        %v1996 = vadd.f32 %v231, %v1907
        %v1997 = vadd.f32 %v232, %v1911
        %v1998 = vadd.f32 %v233, %v1910
        %v1999 = vadd.f32 %v234, %v1914
        %v2000 = vadd.f32 %v235, %v1913
        %v2001 = vadd.f32 %v236, %v1917
        %v2002 = vadd.f32 %v237, %v1916
        %v2003 = vadd.f32 %v238, %v1920
        %v2004 = vadd.f32 %v239, %v1919
        %v2005 = vadd.f32 %v240, %v1923
        %v2006 = vadd.f32 %v241, %v1922
        %v2007 = vadd.f32 %v242, %v1926
        %v2008 = vadd.f32 %v243, %v1925
        %v2009 = vadd.f32 %v244, %v1929
        %v2010 = vadd.f32 %v245, %v1928
        %v2011 = vadd.f32 %v246, %v1932
        %v2012 = vadd.f32 %v247, %v1931
        %v2013 = vadd.f32 %v248, %v1935
        %v2014 = vadd.f32 %v249, %v1934
        %v2015 = vadd.f32 %v250, %v1938
        %v2016 = vadd.f32 %v251, %v1937
        %v2017 = vadd.f32 %v252, %v1941
        %v2018 = vadd.f32 %v253, %v1940
        %v2019 = vadd.f32 %v254, %v1944
        %v2020 = vadd.f32 %v255, %v1943
        %v2059 = vrot.slane %v1983, 1
        %v2060 = vrot.slane %v1984, 1
        %v2061 = vsel %vm294, %v2059, %v2060
        %v2062 = vrot.slane %v1985, 1
        %v2063 = vrot.slane %v1986, 1
        %v2064 = vsel %vm294, %v2062, %v2063
        %v2065 = vrot.slane %v1987, 1
        %v2066 = vrot.slane %v1988, 1
        %v2067 = vsel %vm294, %v2065, %v2066
        %v2068 = vrot.slane %v1989, 1
        %v2069 = vrot.slane %v1990, 1
        %v2070 = vsel %vm294, %v2068, %v2069
        %v2071 = vrot.slane %v1991, 1
        %v2072 = vrot.slane %v1992, 1
        %v2073 = vsel %vm294, %v2071, %v2072
        %v2074 = vrot.slane %v1993, 1
        %v2075 = vrot.slane %v1994, 1
        %v2076 = vsel %vm294, %v2074, %v2075
        %v2077 = vrot.slane %v1995, 1
        %v2078 = vrot.slane %v1996, 1
        %v2079 = vsel %vm294, %v2077, %v2078
        %v2080 = vrot.slane %v1997, 1
        %v2081 = vrot.slane %v1998, 1
        %v2082 = vsel %vm294, %v2080, %v2081
        %v2083 = vrot.slane %v1999, 1
        %v2084 = vrot.slane %v2000, 1
        %v2085 = vsel %vm294, %v2083, %v2084
        %v2086 = vrot.slane %v2001, 1
        %v2087 = vrot.slane %v2002, 1
        %v2088 = vsel %vm294, %v2086, %v2087
        %v2089 = vrot.slane %v2003, 1
        %v2090 = vrot.slane %v2004, 1
        %v2091 = vsel %vm294, %v2089, %v2090
        %v2092 = vrot.slane %v2005, 1
        %v2093 = vrot.slane %v2006, 1
        %v2094 = vsel %vm294, %v2092, %v2093
        %v2095 = vrot.slane %v2007, 1
        %v2096 = vrot.slane %v2008, 1
        %v2097 = vsel %vm294, %v2095, %v2096
        %v2098 = vrot.slane %v2009, 1
        %v2099 = vrot.slane %v2010, 1
        %v2100 = vsel %vm294, %v2098, %v2099
        %v2101 = vrot.slane %v2011, 1
        %v2102 = vrot.slane %v2012, 1
        %v2103 = vsel %vm294, %v2101, %v2102
        %v2104 = vrot.slane %v2013, 1
        %v2105 = vrot.slane %v2014, 1
        %v2106 = vsel %vm294, %v2104, %v2105
        %v2107 = vrot.slane %v2015, 1
        %v2108 = vrot.slane %v2016, 1
        %v2109 = vsel %vm294, %v2107, %v2108
        %v2110 = vrot.slane %v2017, 1
        %v2111 = vrot.slane %v2018, 1
        %v2112 = vsel %vm294, %v2110, %v2111
        %v2113 = vrot.slane %v2019, 1
        %v2114 = vrot.slane %v2020, 1
        %v2115 = vsel %vm294, %v2113, %v2114
        %v2135 = vpack.c.bf16 %v2064, %v2061
        %v2136 = vpack.c.bf16 %v2070, %v2067
        %v2137 = vpack.c.bf16 %v2076, %v2073
        %v2138 = vpack.c.bf16 %v2082, %v2079
        %v2139 = vpack.c.bf16 %v2088, %v2085
        %v2140 = vpack.c.bf16 %v2094, %v2091
        %v2141 = vpack.c.bf16 %v2100, %v2097
        %v2142 = vpack.c.bf16 %v2106, %v2103
        %v2143 = vpack.c.bf16 %v2112, %v2109
        %v2144 = vpack.c.bf16 %v2115, %v2115
        %v2146 = vsel %vm406, %v2135, 0
        %v2149 = vsel %vm406, %v2136, 0
        %v2152 = vsel %vm406, %v2137, 0
        %v2155 = vsel %vm406, %v2138, 0
        %v2158 = vsel %vm406, %v2139, 0
        %v2161 = vsel %vm406, %v2140, 0
        %v2164 = vsel %vm406, %v2141, 0
        %v2167 = vsel %vm406, %v2142, 0
        %v2170 = vsel %vm406, %v2143, 0
        %v2173 = vsel %vm406, %v2144, 0
        %2175 = vmatpush.bf16.msra.mxu0 0
        %2176 = vmatpush.bf16.msra.mxu0 0
        %2177 = vmatpush.bf16.msra.mxu0 0
        %2178 = vmatpush.bf16.msra.mxu0 0
        %2179 = vmatpush.bf16.msra.mxu0 0
        %2180 = vmatpush.bf16.msra.mxu0 0
        %2181 = vmatpush.bf16.msra.mxu0 0
        %2182 = vmatpush.bf16.msra.mxu0 %v404
        %2183 = vmatmul.bf16.gmra.mxu0 %v2146
        %v2184 = vpop.f32.mrf.mxu0
        %v2185 = vadd.f32 0.0, %v2184
        %v2186 = vpop.f32.mrf.mxu0
        %v2187 = vadd.f32 0.0, %v2186
        %2188 = vmatmul.bf16.gmra.mxu0 %v2149
        %v2189 = vpop.f32.mrf.mxu0
        %v2190 = vadd.f32 0.0, %v2189
        %v2191 = vpop.f32.mrf.mxu0
        %v2192 = vadd.f32 0.0, %v2191
        %2193 = vmatmul.bf16.gmra.mxu0 %v2152
        %v2194 = vpop.f32.mrf.mxu0
        %v2195 = vadd.f32 0.0, %v2194
        %v2196 = vpop.f32.mrf.mxu0
        %v2197 = vadd.f32 0.0, %v2196
        %2198 = vmatmul.bf16.gmra.mxu0 %v2155
        %v2199 = vpop.f32.mrf.mxu0
        %v2200 = vadd.f32 0.0, %v2199
        %v2201 = vpop.f32.mrf.mxu0
        %v2202 = vadd.f32 0.0, %v2201
        %2203 = vmatmul.bf16.gmra.mxu0 %v2158
        %v2204 = vpop.f32.mrf.mxu0
        %v2205 = vadd.f32 0.0, %v2204
        %v2206 = vpop.f32.mrf.mxu0
        %v2207 = vadd.f32 0.0, %v2206
        %2208 = vmatmul.bf16.gmra.mxu0 %v2161
        %v2209 = vpop.f32.mrf.mxu0
        %v2210 = vadd.f32 0.0, %v2209
        %v2211 = vpop.f32.mrf.mxu0
        %v2212 = vadd.f32 0.0, %v2211
        %2213 = vmatmul.bf16.gmra.mxu0 %v2164
        %v2214 = vpop.f32.mrf.mxu0
        %v2215 = vadd.f32 0.0, %v2214
        %v2216 = vpop.f32.mrf.mxu0
        %v2217 = vadd.f32 0.0, %v2216
        %2218 = vmatmul.bf16.gmra.mxu0 %v2167
        %v2219 = vpop.f32.mrf.mxu0
        %v2220 = vadd.f32 0.0, %v2219
        %v2221 = vpop.f32.mrf.mxu0
        %v2222 = vadd.f32 0.0, %v2221
        %2223 = vmatmul.bf16.gmra.mxu0 %v2170
        %v2224 = vpop.f32.mrf.mxu0
        %v2225 = vadd.f32 0.0, %v2224
        %v2226 = vpop.f32.mrf.mxu0
        %v2227 = vadd.f32 0.0, %v2226
        %2228 = vmatmul.bf16.gmra.mxu0 %v2173
        %v2229 = vpop.f32.mrf.mxu0
        %v2230 = vadd.f32 0.0, %v2229
        %v2231 = vpop.f32.mrf.mxu0
        %2232 = vdwg.mxu0
        %v2233 = vsel %vm495, %v2185, -inf
        %v2234 = vsel %vm495, %v2187, -inf
        %v2235 = vsel %vm495, %v2190, -inf
        %v2236 = vsel %vm495, %v2192, -inf
        %v2237 = vsel %vm495, %v2195, -inf
        %v2238 = vmax.f32 %v2233, %v2237
        %v2239 = vsel %vm495, %v2197, -inf
        %v2240 = vmax.f32 %v2234, %v2239
        %v2241 = vsel %vm495, %v2200, -inf
        %v2242 = vmax.f32 %v2235, %v2241
        %v2243 = vsel %vm495, %v2202, -inf
        %v2244 = vmax.f32 %v2236, %v2243
        %v2245 = vsel %vm495, %v2205, -inf
        %v2246 = vmax.f32 %v2238, %v2245
        %v2247 = vsel %vm495, %v2207, -inf
        %v2248 = vmax.f32 %v2240, %v2247
        %v2249 = vsel %vm495, %v2210, -inf
        %v2250 = vmax.f32 %v2242, %v2249
        %v2251 = vsel %vm495, %v2212, -inf
        %v2252 = vmax.f32 %v2244, %v2251
        %v2253 = vsel %vm495, %v2215, -inf
        %v2254 = vmax.f32 %v2246, %v2253
        %v2255 = vsel %vm495, %v2217, -inf
        %v2256 = vmax.f32 %v2248, %v2255
        %v2257 = vsel %vm495, %v2220, -inf
        %v2258 = vmax.f32 %v2250, %v2257
        %v2259 = vsel %vm495, %v2222, -inf
        %v2260 = vmax.f32 %v2252, %v2259
        %v2261 = vsel %vm495, %v2225, -inf
        %v2262 = vmax.f32 %v2254, %v2261
        %v2263 = vsel %vm495, %v2227, -inf
        %v2264 = vmax.f32 %v2256, %v2263
        %v2265 = vsel %vm495, %v2230, -inf
        %v2266 = vmax.f32 %v2258, %v2265
        %v2267 = vmax.f32 %v2262, %v2264
        %v2268 = vmax.f32 %v2266, %v2260
        %v2269 = vmax.f32 %v2267, %v2268
        %v2270 = vsub.f32 %v2185, %v2269
        %v2271 = vsub.f32 %v2187, %v2269
        %v2272 = vsub.f32 %v2190, %v2269
        %v2273 = vsub.f32 %v2192, %v2269
        %v2274 = vsub.f32 %v2195, %v2269
        %v2275 = vsub.f32 %v2197, %v2269
        %v2276 = vsub.f32 %v2200, %v2269
        %v2277 = vsub.f32 %v2202, %v2269
        %v2278 = vsub.f32 %v2205, %v2269
        %v2279 = vsub.f32 %v2207, %v2269
        %v2280 = vsub.f32 %v2210, %v2269
        %v2281 = vsub.f32 %v2212, %v2269
        %v2282 = vsub.f32 %v2215, %v2269
        %v2283 = vsub.f32 %v2217, %v2269
        %v2284 = vsub.f32 %v2220, %v2269
        %v2285 = vsub.f32 %v2222, %v2269
        %v2286 = vsub.f32 %v2225, %v2269
        %v2287 = vsub.f32 %v2227, %v2269
        %v2288 = vsub.f32 %v2230, %v2269
        %v2289 = vmul.f32 %v2270, 1.442695
        %v2290 = vpow.pop %v2289
        %v2291 = vmul.f32 %v2271, 1.442695
        %v2292 = vpow.pop %v2291
        %v2293 = vmul.f32 %v2272, 1.442695
        %v2294 = vpow.pop %v2293
        %v2295 = vmul.f32 %v2273, 1.442695
        %v2296 = vpow.pop %v2295
        %v2297 = vmul.f32 %v2274, 1.442695
        %v2298 = vpow.pop %v2297
        %v2299 = vmul.f32 %v2275, 1.442695
        %v2300 = vpow.pop %v2299
        %v2301 = vmul.f32 %v2276, 1.442695
        %v2302 = vpow.pop %v2301
        %v2303 = vmul.f32 %v2277, 1.442695
        %v2304 = vpow.pop %v2303
        %v2305 = vmul.f32 %v2278, 1.442695
        %v2306 = vpow.pop %v2305
        %v2307 = vmul.f32 %v2279, 1.442695
        %v2308 = vpow.pop %v2307
        %v2309 = vmul.f32 %v2280, 1.442695
        %v2310 = vpow.pop %v2309
        %v2311 = vmul.f32 %v2281, 1.442695
        %v2312 = vpow.pop %v2311
        %v2313 = vmul.f32 %v2282, 1.442695
        %v2314 = vpow.pop %v2313
        %v2315 = vmul.f32 %v2283, 1.442695
        %v2316 = vpow.pop %v2315
        %v2317 = vmul.f32 %v2284, 1.442695
        %v2318 = vpow.pop %v2317
        %v2319 = vmul.f32 %v2285, 1.442695
        %v2320 = vpow.pop %v2319
        %v2321 = vmul.f32 %v2286, 1.442695
        %v2322 = vpow.pop %v2321
        %v2323 = vmul.f32 %v2287, 1.442695
        %v2324 = vpow.pop %v2323
        %v2325 = vmul.f32 %v2288, 1.442695
        %v2326 = vpow.pop %v2325
        %v2327 = vsel %vm495, %v2290, 0.0
        %v2328 = vsel %vm495, %v2292, 0.0
        %v2329 = vadd.f32 %v2327, %v2328
        %v2330 = vsel %vm495, %v2294, 0.0
        %v2331 = vadd.f32 %v2329, %v2330
        %v2332 = vsel %vm495, %v2296, 0.0
        %v2333 = vadd.f32 %v2331, %v2332
        %v2334 = vsel %vm495, %v2298, 0.0
        %v2335 = vadd.f32 %v2333, %v2334
        %v2336 = vsel %vm495, %v2300, 0.0
        %v2337 = vadd.f32 %v2335, %v2336
        %v2338 = vsel %vm495, %v2302, 0.0
        %v2339 = vadd.f32 %v2337, %v2338
        %v2340 = vsel %vm495, %v2304, 0.0
        %v2341 = vadd.f32 %v2339, %v2340
        %v2342 = vsel %vm495, %v2306, 0.0
        %v2343 = vadd.f32 %v2341, %v2342
        %v2344 = vsel %vm495, %v2308, 0.0
        %v2345 = vadd.f32 %v2343, %v2344
        %v2346 = vsel %vm495, %v2310, 0.0
        %v2347 = vadd.f32 %v2345, %v2346
        %v2348 = vsel %vm495, %v2312, 0.0
        %v2349 = vadd.f32 %v2347, %v2348
        %v2350 = vsel %vm495, %v2314, 0.0
        %v2351 = vadd.f32 %v2349, %v2350
        %v2352 = vsel %vm495, %v2316, 0.0
        %v2353 = vadd.f32 %v2351, %v2352
        %v2354 = vsel %vm495, %v2318, 0.0
        %v2355 = vadd.f32 %v2353, %v2354
        %v2356 = vsel %vm495, %v2320, 0.0
        %v2357 = vadd.f32 %v2355, %v2356
        %v2358 = vsel %vm495, %v2322, 0.0
        %v2359 = vadd.f32 %v2357, %v2358
        %v2360 = vsel %vm495, %v2324, 0.0
        %v2361 = vadd.f32 %v2359, %v2360
        %v2362 = vsel %vm495, %v2326, 0.0
        %v2363 = vadd.f32 %v2361, %v2362
        %v2364 = vrcp.pop %v2363
        %v2365 = vmul.f32 %v2290, %v2364
        %v2366 = vmul.f32 %v2292, %v2364
        %v2367 = vmul.f32 %v2294, %v2364
        %v2368 = vmul.f32 %v2296, %v2364
        %v2369 = vmul.f32 %v2298, %v2364
        %v2370 = vmul.f32 %v2300, %v2364
        %v2371 = vmul.f32 %v2302, %v2364
        %v2372 = vmul.f32 %v2304, %v2364
        %v2373 = vmul.f32 %v2306, %v2364
        %v2374 = vmul.f32 %v2308, %v2364
        %v2375 = vmul.f32 %v2310, %v2364
        %v2376 = vmul.f32 %v2312, %v2364
        %v2377 = vmul.f32 %v2314, %v2364
        %v2378 = vmul.f32 %v2316, %v2364
        %v2379 = vmul.f32 %v2318, %v2364
        %v2380 = vmul.f32 %v2320, %v2364
        %v2381 = vmul.f32 %v2322, %v2364
        %v2382 = vmul.f32 %v2324, %v2364
        %v2383 = vmul.f32 %v2326, %v2364
        %v2384 = vpack.c.bf16 %v2365, %v2365
        %v2385 = vpack.c.bf16 %v2366, %v2366
        %v2386 = vpack.c.bf16 %v2367, %v2367
        %v2387 = vpack.c.bf16 %v2368, %v2368
        %v2388 = vpack.c.bf16 %v2369, %v2369
        %v2389 = vpack.c.bf16 %v2370, %v2370
        %v2390 = vpack.c.bf16 %v2371, %v2371
        %v2391 = vpack.c.bf16 %v2372, %v2372
        %v2392 = vpack.c.bf16 %v2373, %v2373
        %v2393 = vpack.c.bf16 %v2374, %v2374
        %v2394 = vpack.c.bf16 %v2375, %v2375
        %v2395 = vpack.c.bf16 %v2376, %v2376
        %v2396 = vpack.c.bf16 %v2377, %v2377
        %v2397 = vpack.c.bf16 %v2378, %v2378
        %v2398 = vpack.c.bf16 %v2379, %v2379
        %v2399 = vpack.c.bf16 %v2380, %v2380
        %v2400 = vpack.c.bf16 %v2381, %v2381
        %v2401 = vpack.c.bf16 %v2382, %v2382
        %v2402 = vpack.c.bf16 %v2383, %v2383
        %2422 = vrot.lane.b32.xlu0 %v2384, 64
        %v2423 = vpop.permute.xlu0 %2422
        %2424 = vrot.lane.b32.xlu0 %v2385, 64
        %v2425 = vpop.permute.xlu0 %2424
        %2426 = vrot.lane.b32.xlu0 %v2386, 64
        %v2427 = vpop.permute.xlu0 %2426
        %2428 = vrot.lane.b32.xlu0 %v2387, 64
        %v2429 = vpop.permute.xlu0 %2428
        %2430 = vrot.lane.b32.xlu0 %v2388, 64
        %v2431 = vpop.permute.xlu0 %2430
        %2432 = vrot.lane.b32.xlu0 %v2389, 64
        %v2433 = vpop.permute.xlu0 %2432
        %2434 = vrot.lane.b32.xlu0 %v2390, 64
        %v2435 = vpop.permute.xlu0 %2434
        %2436 = vrot.lane.b32.xlu0 %v2391, 64
        %v2437 = vpop.permute.xlu0 %2436
        %2438 = vrot.lane.b32.xlu0 %v2392, 64
        %v2439 = vpop.permute.xlu0 %2438
        %2440 = vrot.lane.b32.xlu0 %v2393, 64
        %v2441 = vpop.permute.xlu0 %2440
        %2442 = vrot.lane.b32.xlu0 %v2394, 64
        %v2443 = vpop.permute.xlu0 %2442
        %2444 = vrot.lane.b32.xlu0 %v2395, 64
        %v2445 = vpop.permute.xlu0 %2444
        %2446 = vrot.lane.b32.xlu0 %v2396, 64
        %v2447 = vpop.permute.xlu0 %2446
        %2448 = vrot.lane.b32.xlu0 %v2397, 64
        %v2449 = vpop.permute.xlu0 %2448
        %2450 = vrot.lane.b32.xlu0 %v2398, 64
        %v2451 = vpop.permute.xlu0 %2450
        %2452 = vrot.lane.b32.xlu0 %v2399, 64
        %v2453 = vpop.permute.xlu0 %2452
        %2454 = vrot.lane.b32.xlu0 %v2400, 64
        %v2455 = vpop.permute.xlu0 %2454
        %2456 = vrot.lane.b32.xlu0 %v2401, 64
        %v2457 = vpop.permute.xlu0 %2456
        %2458 = vrot.lane.b32.xlu0 %v2402, 64
        %v2459 = vpop.permute.xlu0 %2458
        %2479 = vst.msk [vmem:[%s150 + $0x4] sm:$0xf] %vm1220, %v2423
        %2480 = vst.msk [vmem:[%s150 + $0xc] sm:$0xf] %vm1220, %v2425
        %2481 = vst.msk [vmem:[%s150 + $0x14] sm:$0xf] %vm1220, %v2427
        %2482 = vst.msk [vmem:[%s150 + $0x1c] sm:$0xf] %vm1220, %v2429
        %2483 = vst.msk [vmem:[%s150 + $0x24] sm:$0xf] %vm1220, %v2431
        %2484 = vst.msk [vmem:[%s150 + $0x2c] sm:$0xf] %vm1220, %v2433
        %2485 = vst.msk [vmem:[%s150 + $0x34] sm:$0xf] %vm1220, %v2435
        %2486 = vst.msk [vmem:[%s150 + $0x3c] sm:$0xf] %vm1220, %v2437
        %2487 = vst.msk [vmem:[%s150 + $0x44] sm:$0xf] %vm1220, %v2439
        %2488 = vst.msk [vmem:[%s150 + $0x4c] sm:$0xf] %vm1220, %v2441
        %2489 = vst.msk [vmem:[%s150 + $0x54] sm:$0xf] %vm1220, %v2443
        %2490 = vst.msk [vmem:[%s150 + $0x5c] sm:$0xf] %vm1220, %v2445
        %2491 = vst.msk [vmem:[%s150 + $0x64] sm:$0xf] %vm1220, %v2447
        %2492 = vst.msk [vmem:[%s150 + $0x6c] sm:$0xf] %vm1220, %v2449
        %2493 = vst.msk [vmem:[%s150 + $0x74] sm:$0xf] %vm1220, %v2451
        %2494 = vst.msk [vmem:[%s150 + $0x7c] sm:$0xf] %vm1220, %v2453
        %2495 = vst.msk [vmem:[%s150 + $0x84] sm:$0xf] %vm1220, %v2455
        %2496 = vst.msk [vmem:[%s150 + $0x8c] sm:$0xf] %vm1220, %v2457
        %2497 = vst.msk [vmem:[%s150 + $0x94] sm:$0xf] %vm1220, %v2459
        %s2498 = sand.u32 %s85, 1
        %s2499 = scalar_lea.sflag [#allocation3], %s2498
        %s2500 = sand.u32 %s85, 1
        %s2501 = smul.addr %s2500, 152
        %s2502 = scalar_lea.vmem [#allocation2], %s2501
        // Predicated region
        $region29: #{tpu_custom_call.1} parent=27 // pred_check
          %p2503 = pneg %p95
        $region30: #{tpu_custom_call.1} parent=27 // pred_check_branch
          %2505 = sbr.rel (%p2503) target = $region32
        $region31: #{tpu_custom_call.1} parent=27 // pred_region
          %2507 = vsyncadd %s2499, 0
          %s2508 = smul.addr %s21, 2
          %s2509 = smul.addr %s20, 76
          %s2510 = sadd.s32 %s2508, %s2509
          %s2511 = smul.addr %s2510, 4
          %s2512 = scalar_lea.hbm %s2, %s2511
          %s2513 = sshll.u32 %s2502, 4
          %s2514 = int_to_ptr.vmem [resolvable:$true] %s2513
          %s2515 = sshll.u32 %s2512, 4
          %s2516 = int_to_ptr.hbm [resolvable:$true] %s2515
          %2521 = dma.vmem_to_hbm [thread:$0]  %s2514, 2432, %s2516, %s2499, 128, 256, 8
        $region32: #{tpu_custom_call.1} parent=27 // pred_fallthru
          _
      $region28: #{tpu_custom_call.1} parent=5 // pred_fallthru
        _
      %p2522 = scmp.le.s32.totalorder 2, %s11
      // Predicated region
      $region33: #{tpu_custom_call.1} parent=5 // pred_check
        %p2523 = pneg %p2522
      $region34: #{tpu_custom_call.1} parent=5 // pred_check_branch
        %2525 = sbr.rel (%p2523) target = $region36
      $region35: #{tpu_custom_call.1} parent=5 // pred_region
        %s2526 = ssub.s32 %s11, 2
        // Predicated region
        $region37: #{tpu_custom_call.1} parent=35 // pred_check
          %p2527 = pneg %p101
        $region38: #{tpu_custom_call.1} parent=35 // pred_check_branch
          %2529 = sbr.rel (%p2527) target = $region40
        $region39: #{tpu_custom_call.1} parent=35 // pred_region
          %s2530 = sand.u32 %s86, 1
          %s2531 = scalar_lea.sflag [#allocation3], %s2530
          %s2532 = sand.u32 %s86, 1
          %s2533 = smul.addr %s2532, 152
          %s2534 = scalar_lea.vmem [#allocation2], %s2533
          %2536 = dma.done %s2531, 2432
        $region40: #{tpu_custom_call.1} parent=35 // pred_fallthru
          _
      $region36: #{tpu_custom_call.1} parent=5 // pred_fallthru
        _
    $region6: #{tpu_custom_call.1} parent=1 // loop_footer
      %s15 = sadd.s32 1, %s11
    $region7: #{tpu_custom_call.1} parent=1 // loop_footer_branch
      %10 = sbr.rel target = $region3
    $region8: #{tpu_custom_call.1} parent=1 // loop_exit
      _
    %2537 = vsyncpa [#allocation3], 1
    %s2538 = scalar_lea.sflag [#allocation3], 1
    %2539 = vsyncpa %s2538, 1

</llo_original>
